<compile_context>
chip_gen: v5e
topology: v5e:2x2
jax: 0.10.0
libtpu: 0.0.40
codegen_flags: <defaults>
</compile_context>

<pallas_src>
import jax
import jax.numpy as jnp
from jax import lax
from jax.experimental import pallas as pl
from jax.experimental.pallas import tpu as pltpu

SELU_ALPHA = 1.6732632423543772
SELU_SCALE = 1.0507009873554805

# bf16 conv-stage MXU operands (f32 accumulation, attention path stays f32).
# Set to jnp.float32 for exact (<3e-3) agreement with the reference.
CONV_DTYPE = jnp.bfloat16
# approx=True uses the EUP reciprocal (free slot); rows then don't sum exactly
# to 1.  Flip to False for an exact-division fallback.
APPROX_RECIP = True


def _choose_bb(batch, hw, lane_target=256):
    """How many samples to pack into the lane dim per grid step."""
    want = max(1, lane_target // hw)
    bb = 1
    for d in range(1, min(batch, want) + 1):
        if batch % d == 0:
            bb = d
    # Keep >= 2 grid steps when possible so the parallel batch axis can shard
    # across the two TensorCores on v7x (on v5e/v6e the grid is a serial loop).
    while bb > 1 and batch // bb < 2:
        bb -= 1
        while bb > 1 and batch % bb:
            bb -= 1
    return bb


# ----------------------------------------------------------------------------
# Wrapper: layout plumbing (packed im2col, BN fold, QKV fuse) + fused kernel
# ----------------------------------------------------------------------------
def dam_forward(x, P, lane_target=256):
    B, Cin, H, W = x.shape
    HW = H * W
    K = Cin * 9
    Cf = P["w_pa"].shape[0]
    Cq = P["wq"].shape[0]
    Cqp = ((Cq + 7) // 8) * 8           # pad Cq to a sublane multiple
    Cout = P["w_sum"].shape[0]
    Bb = _choose_bb(B, HW, lane_target)
    Gb = B // Bb
    N = Bb * HW                         # lanes per grid step (lane-dense)

    # --- wrapper-side layout plumbing (pure XLA, no compute hoisted) --------
    # im2col in (Gb, K, Bb*HW) layout: K-major matches w.reshape(Cf, K); the
    # lane dim packs Bb samples' spatial maps back-to-back.
    # TODO(synk): in-kernel im2col (9 shifted matmuls over a padded VMEM tile)
    # would cut HBM activation traffic ~9x for large feature maps.
    xp = jnp.pad(x, ((0, 0), (0, 0), (1, 1), (1, 1)))
    patches = jnp.stack(
        [xp[:, :, kh:kh + H, kw:kw + W] for kh in range(3) for kw in range(3)],
        axis=2)                                             # (B, Cin, 9, H, W)
    patches = patches.reshape(Gb, Bb, K, HW).transpose(0, 2, 1, 3)
    patches = patches.reshape(Gb, K, N).astype(CONV_DTYPE)

    # Both conv branches fused into one matmul; eval-mode BN scale folded in.
    w_conv = jnp.concatenate(
        [P["w_pa"].reshape(Cf, K) * P["scale_pa"][:, None],
         P["w_ca"].reshape(Cf, K) * P["scale_ca"][:, None]],
        axis=0).astype(CONV_DTYPE)                          # (2Cf, K)
    b_conv = jnp.concatenate(
        [P["bias_pa"], P["bias_ca"]]).reshape(2 * Cf, 1).astype(jnp.float32)

    def pad_rows(a, rows):
        extra = rows - a.shape[0]
        return jnp.concatenate(
            [a, jnp.zeros((extra,) + a.shape[1:], a.dtype)], axis=0)

    # Fused, 8-aligned Q/K/V projection; gamma_pa pre-folded into the V rows;
    # the zero-padded q/k rows contribute exactly 0 to the energy.
    g_pa = P["gamma_pa"].reshape(())
    w_qkv = jnp.concatenate(
        [pad_rows(P["wq"], Cqp), pad_rows(P["wk"], Cqp), g_pa * P["wv"]], axis=0)
    b_qkv = jnp.concatenate(
        [pad_rows(P["bq"], Cqp), pad_rows(P["bk"], Cqp), g_pa * P["bv"]], axis=0)

    gamma_ca = P["gamma_ca"].reshape(1).astype(jnp.float32)

    # --- fused kernel -------------------------------------------------------
    def kernel(patch_ref, wconv_ref, bconv_ref, wqkv_ref, bqkv_ref,
               wsum_ref, bsum_ref, gca_ref, o_ref):
        def recip(v):
            return pl.reciprocal(v, approx=True) if APPROX_RECIP else 1.0 / v

        # Both 3x3 conv branches in ONE MXU pass: (2Cf,K)@(K,N) + bias + SELU.
        y = jnp.dot(wconv_ref[...], patch_ref[...],
                    preferred_element_type=jnp.float32) + bconv_ref[...]
        y = SELU_SCALE * jnp.where(y > 0, y, SELU_ALPHA * (jnp.exp(y) - 1.0))
        pf = y[:Cf]                                         # (Cf, N) PAM branch
        cf = y[Cf:]                                         # (Cf, N) CAM branch

        # Fused Q/K/V 1x1 conv on the whole lane-packed slab.
        qkv = jnp.dot(wqkv_ref[...], pf,
                      preferred_element_type=jnp.float32) + bqkv_ref[...]
        g_ca = gca_ref[0]

        # Attention is per-sample; Bb is a tiny static count, so a static loop
        # over the 128-aligned HW lane slices keeps the big matmuls lane-dense
        # while PAM/CAM stay sample-local.
        outs = []
        for b in range(Bb):
            sl = slice(b * HW, (b + 1) * HW)
            q = qkv[:Cqp, sl]                               # (Cqp, HW)
            k = qkv[Cqp:2 * Cqp, sl]                        # (Cqp, HW)
            v = qkv[2 * Cqp:, sl]                           # (Cf, HW) *gamma_pa
            pfb = pf[:, sl]
            cfb = cf[:, sl]

            # ---- PAM: energy[s,t] = sum_c q[c,s] k[c,t] (no explicit .T) ---
            energy = lax.dot_general(q, k, (((0,), (0,)), ((), ())),
                                     preferred_element_type=jnp.float32)
            energy = energy - jnp.max(energy, axis=-1, keepdims=True)
            e = jnp.exp(energy)
            att = e * recip(jnp.sum(e, axis=-1, keepdims=True))
            # out[c,s] = sum_t v[c,t] att[s,t]
            p_out = lax.dot_general(v, att, (((1,), (1,)), ((), ())),
                                    preferred_element_type=jnp.float32) + pfb

            # ---- CAM: softmax(rowmax-cen) == exp(rowmin-cen)/rowsum --------
            cen = lax.dot_general(cfb, cfb, (((1,), (1,)), ((), ())),
                                  preferred_element_type=jnp.float32)
            e2 = jnp.exp(jnp.min(cen, axis=-1, keepdims=True) - cen)
            att2 = e2 * (g_ca * recip(jnp.sum(e2, axis=-1, keepdims=True)))
            c_out = jnp.dot(att2, cfb,
                            preferred_element_type=jnp.float32) + cfb

            outs.append(p_out + c_out)

        # Dropout2d(eval)=identity; add; final 1x1 conv on the full slab so the
        # output store is a single lane-dense (Cout, N) vst.
        s = outs[0] if Bb == 1 else jnp.concatenate(outs, axis=1)
        o_ref[...] = jnp.dot(wsum_ref[...], s,
                             preferred_element_type=jnp.float32) + bsum_ref[...]

    out = pl.pallas_call(
        kernel,
        out_shape=jax.ShapeDtypeStruct((Gb, Cout, N), jnp.float32),
        grid=(Gb,),
        in_specs=[
            pl.BlockSpec((None, K, N), lambda g: (g, 0, 0)),       # patches
            pl.BlockSpec((2 * Cf, K), lambda g: (0, 0)),           # w_conv
            pl.BlockSpec((2 * Cf, 1), lambda g: (0, 0)),           # b_conv
            pl.BlockSpec((2 * Cqp + Cf, Cf), lambda g: (0, 0)),    # w_qkv
            pl.BlockSpec((2 * Cqp + Cf, 1), lambda g: (0, 0)),     # b_qkv
            pl.BlockSpec((Cout, Cf), lambda g: (0, 0)),            # w_sum
            pl.BlockSpec((Cout, 1), lambda g: (0, 0)),             # b_sum
            pl.BlockSpec(memory_space=pltpu.MemorySpace.SMEM),     # gamma_ca
        ],
        out_specs=pl.BlockSpec((None, Cout, N), lambda g: (g, 0, 0)),
        compiler_params=pltpu.CompilerParams(
            dimension_semantics=("parallel",)),    # batch groups shard over TCs
    )(patches, w_conv, b_conv, w_qkv, b_qkv, P["w_sum"], P["b_sum"], gamma_ca)

    # Unpack the lane-packed batch back to (B, Cout, H, W).
    out = out.reshape(Gb, Cout, Bb, HW).transpose(0, 2, 1, 3)
    return out.reshape(B, Cout, H, W)


# ----------------------------------------------------------------------------
# Pure-JAX reference (correctness check only)
# ----------------------------------------------------------------------------
def _selu(x):
    return SELU_SCALE * jnp.where(x > 0, x, SELU_ALPHA * (jnp.exp(x) - 1.0))


def dam_ref(x, P):
    B, Cin, H, W = x.shape
    HW = H * W

    def conv_bn_selu_ref(x, w, scale, bias):
        y = lax.conv_general_dilated(x, w, (1, 1), ((1, 1), (1, 1)),
                                     dimension_numbers=("NCHW", "OIHW", "NCHW"))
        y = y * scale[None, :, None, None] + bias[None, :, None, None]
        return _selu(y)

    pf = conv_bn_selu_ref(x, P["w_pa"], P["scale_pa"], P["bias_pa"]).reshape(B, -1, HW)
    cf = conv_bn_selu_ref(x, P["w_ca"], P["scale_ca"], P["bias_ca"]).reshape(B, -1, HW)

    # PAM
    q = jnp.einsum("oc,bcs->bos", P["wq"], pf) + P["bq"].reshape(1, -1, 1)
    k = jnp.einsum("oc,bcs->bos", P["wk"], pf) + P["bk"].reshape(1, -1, 1)
    v = jnp.einsum("oc,bcs->bos", P["wv"], pf) + P["bv"].reshape(1, -1, 1)
    energy = jnp.einsum("bos,bot->bst", q, k)
    att = jax.nn.softmax(energy, axis=-1)
    p_out = P["gamma_pa"][0, 0] * jnp.einsum("bcs,bts->bct", v, att) + pf

    # CAM
    energy = jnp.einsum("bcs,bds->bcd", cf, cf)
    energy = jnp.max(energy, axis=-1, keepdims=True) - energy
    att = jax.nn.softmax(energy, axis=-1)
    c_out = P["gamma_ca"][0, 0] * jnp.einsum("bcd,bds->bcs", att, cf) + cf

    s = p_out + c_out
    out = jnp.einsum("oc,bcs->bos", P["w_sum"], s) + P["b_sum"].reshape(1, -1, 1)
    return out.reshape(B, -1, H, W)


# ----------------------------------------------------------------------------
if __name__ == "__main__":
    key = jax.random.PRNGKey(0)
    # HW=128 keeps per-sample lane slices 128-aligned; Bb=2 -> 256 lanes/step,
    # grid=(2,) so both v7x TensorCores get work.
    B, Cin, H, W = 4, 16, 8, 16
    Cf = 16          # num_filters == in_channels (required by original PAM usage)
    Cout = 8
    reduction = 8
    Cq = Cin // reduction
    eps = 1e-5

    ks = list(jax.random.split(key, 16))
    x = jax.random.normal(ks[0], (B, Cin, H, W), jnp.float32)

    # BN in eval mode: running_mean=0, running_var=1 -> affine scale/bias.
    bn_w_pa = 1.0 + 0.1 * jax.random.normal(ks[3], (Cf,), jnp.float32)
    bn_b_pa = 0.1 * jax.random.normal(ks[4], (Cf,), jnp.float32)
    bn_w_ca = 1.0 + 0.1 * jax.random.normal(ks[5], (Cf,), jnp.float32)
    bn_b_ca = 0.1 * jax.random.normal(ks[6], (Cf,), jnp.float32)

    P = dict(
        w_pa=0.1 * jax.random.normal(ks[1], (Cf, Cin, 3, 3), jnp.float32),
        w_ca=0.1 * jax.random.normal(ks[2], (Cf, Cin, 3, 3), jnp.float32),
        scale_pa=bn_w_pa / jnp.sqrt(1.0 + eps), bias_pa=bn_b_pa,
        scale_ca=bn_w_ca / jnp.sqrt(1.0 + eps), bias_ca=bn_b_ca,
        wq=0.2 * jax.random.normal(ks[7], (Cq, Cf), jnp.float32),
        bq=0.1 * jax.random.normal(ks[8], (Cq, 1), jnp.float32),
        wk=0.2 * jax.random.normal(ks[9], (Cq, Cf), jnp.float32),
        bk=0.1 * jax.random.normal(ks[10], (Cq, 1), jnp.float32),
        wv=0.1 * jax.random.normal(ks[11], (Cf, Cf), jnp.float32),
        bv=0.1 * jax.random.normal(ks[12], (Cf, 1), jnp.float32),
        gamma_pa=jnp.full((1, 1), 0.5, jnp.float32),   # torch inits to 0; nonzero here
        gamma_ca=jnp.full((1, 1), 0.5, jnp.float32),
        w_sum=0.1 * jax.random.normal(ks[13], (Cout, Cf), jnp.float32),
        b_sum=0.1 * jax.random.normal(ks[14], (Cout, 1), jnp.float32),
    )

    out = dam_forward(x, P)
    out = jax.block_until_ready(out)
    ref = jax.block_until_ready(dam_ref(x, P))

    assert out.shape == (B, Cout, H, W)
    # 2e-2 tolerance covers bf16 conv-stage operands + approx EUP reciprocals;
    # with CONV_DTYPE=f32 / APPROX_RECIP=False the kernel matches to <3e-3.
    tol = 2e-2 if CONV_DTYPE == jnp.bfloat16 else 3e-3
    if not jnp.allclose(out, ref, atol=tol, rtol=tol):
        raise AssertionError("Pallas DAM kernel mismatch vs JAX reference")
    # TODO(synk): training-mode BatchNorm (batch statistics) and Dropout2d
    # masking are not implemented; kernel uses eval/inference semantics.
    print("KERNEL_OK")
</pallas_src>

<mosaic_0001>
module attributes {stable_mosaic.version = 11 : i64} {
  func.func @kernel(%arg0: i32, %arg1: memref<1x144x256xbf16, #tpu.memory_space<vmem>>, %arg2: memref<32x144xbf16, #tpu.memory_space<vmem>>, %arg3: memref<32x1xf32, #tpu.memory_space<vmem>>, %arg4: memref<32x16xf32, #tpu.memory_space<vmem>>, %arg5: memref<32x1xf32, #tpu.memory_space<vmem>>, %arg6: memref<8x16xf32, #tpu.memory_space<vmem>>, %arg7: memref<8x1xf32, #tpu.memory_space<vmem>>, %arg8: memref<1xf32, #tpu.memory_space<smem>>, %arg9: memref<1x8x256xf32, #tpu.memory_space<vmem>>) attributes {dimension_semantics = [#tpu.dimension_semantics<parallel>], iteration_bounds = array<i64: 2>, scalar_prefetch = 0 : i64, scratch_operands = 0 : i64, tpu.core_type = #tpu.core_type<tc>, window_params = [{transform_indices = @transform_0, window_bounds = array<i64: 1, 144, 256>}, {pipeline_mode = #tpu.pipeline_mode<synchronous>, transform_indices = @transform_1, window_bounds = array<i64: 32, 144>}, {pipeline_mode = #tpu.pipeline_mode<synchronous>, transform_indices = @transform_2, window_bounds = array<i64: 32, 1>}, {pipeline_mode = #tpu.pipeline_mode<synchronous>, transform_indices = @transform_3, window_bounds = array<i64: 32, 16>}, {pipeline_mode = #tpu.pipeline_mode<synchronous>, transform_indices = @transform_4, window_bounds = array<i64: 32, 1>}, {pipeline_mode = #tpu.pipeline_mode<synchronous>, transform_indices = @transform_5, window_bounds = array<i64: 8, 16>}, {pipeline_mode = #tpu.pipeline_mode<synchronous>, transform_indices = @transform_6, window_bounds = array<i64: 8, 1>}, {transform_indices = @transform_7, window_bounds = array<i64: 1>}, {transform_indices = @transform_8, window_bounds = array<i64: 1, 8, 256>}]} {
    %c0 = arith.constant 0 : index
    %c0_0 = arith.constant 0 : index
    %0 = vector.load %arg2[%c0, %c0_0] : memref<32x144xbf16, #tpu.memory_space<vmem>>, vector<32x144xbf16>
    %c0_1 = arith.constant 0 : index
    %c0_2 = arith.constant 0 : index
    %c0_3 = arith.constant 0 : index
    %1 = vector.load %arg1[%c0_1, %c0_2, %c0_3] : memref<1x144x256xbf16, #tpu.memory_space<vmem>>, vector<1x144x256xbf16>
    %2 = vector.shape_cast %1 : vector<1x144x256xbf16> to vector<144x256xbf16>
    %cst = arith.constant dense<0.000000e+00> : vector<32x256xf32>
    %3 = tpu.matmul %0, %2, %cst {dimension_numbers = #tpu.dot_dimension_numbers<[1], [0], [0], [1], [0, 0, 1, 1], [], []>} : vector<32x144xbf16>, vector<144x256xbf16>, vector<32x256xf32> -> vector<32x256xf32>
    %c0_4 = arith.constant 0 : index
    %c0_5 = arith.constant 0 : index
    %4 = vector.load %arg3[%c0_4, %c0_5] : memref<32x1xf32, #tpu.memory_space<vmem>>, vector<32x1xf32>
    %5 = vector.broadcast %4 : vector<32x1xf32> to vector<32x256xf32>
    %6 = arith.addf %3, %5 : vector<32x256xf32>
    %cst_6 = arith.constant 0.000000e+00 : f32
    %7 = vector.broadcast %cst_6 : f32 to vector<32x256xf32>
    %8 = arith.cmpf ogt, %6, %7 : vector<32x256xf32>
    %9 = math.exp %6 : vector<32x256xf32>
    %cst_7 = arith.constant 1.000000e+00 : f32
    %10 = vector.broadcast %cst_7 : f32 to vector<32x256xf32>
    %11 = arith.subf %9, %10 : vector<32x256xf32>
    %cst_8 = arith.constant 1.67326319 : f32
    %12 = vector.broadcast %cst_8 : f32 to vector<32x256xf32>
    %13 = arith.mulf %12, %11 : vector<32x256xf32>
    %14 = arith.select %8, %6, %13 : vector<32x256xi1>, vector<32x256xf32>
    %cst_9 = arith.constant 1.05070102 : f32
    %15 = vector.broadcast %cst_9 : f32 to vector<32x256xf32>
    %16 = arith.mulf %15, %14 : vector<32x256xf32>
    %17 = vector.extract_strided_slice %16 {offsets = [0, 0], sizes = [16, 256], strides = [1, 1]} : vector<32x256xf32> to vector<16x256xf32>
    %18 = vector.extract_strided_slice %16 {offsets = [16, 0], sizes = [16, 256], strides = [1, 1]} : vector<32x256xf32> to vector<16x256xf32>
    %c0_10 = arith.constant 0 : index
    %c0_11 = arith.constant 0 : index
    %19 = vector.load %arg4[%c0_10, %c0_11] : memref<32x16xf32, #tpu.memory_space<vmem>>, vector<32x16xf32>
    %cst_12 = arith.constant dense<0.000000e+00> : vector<32x256xf32>
    %20 = tpu.matmul %19, %17, %cst_12 {dimension_numbers = #tpu.dot_dimension_numbers<[1], [0], [0], [1], [0, 0, 1, 1], [], []>} : vector<32x16xf32>, vector<16x256xf32>, vector<32x256xf32> -> vector<32x256xf32>
    %c0_13 = arith.constant 0 : index
    %c0_14 = arith.constant 0 : index
    %21 = vector.load %arg5[%c0_13, %c0_14] : memref<32x1xf32, #tpu.memory_space<vmem>>, vector<32x1xf32>
    %22 = vector.broadcast %21 : vector<32x1xf32> to vector<32x256xf32>
    %23 = arith.addf %20, %22 : vector<32x256xf32>
    %c0_15 = arith.constant 0 : index
    %24 = memref.load %arg8[%c0_15] : memref<1xf32, #tpu.memory_space<smem>>
    %25 = vector.extract_strided_slice %23 {offsets = [0, 0], sizes = [8, 128], strides = [1, 1]} : vector<32x256xf32> to vector<8x128xf32>
    %26 = vector.extract_strided_slice %23 {offsets = [8, 0], sizes = [8, 128], strides = [1, 1]} : vector<32x256xf32> to vector<8x128xf32>
    %27 = vector.extract_strided_slice %23 {offsets = [16, 0], sizes = [16, 128], strides = [1, 1]} : vector<32x256xf32> to vector<16x128xf32>
    %28 = vector.extract_strided_slice %17 {offsets = [0, 0], sizes = [16, 128], strides = [1, 1]} : vector<16x256xf32> to vector<16x128xf32>
    %29 = vector.extract_strided_slice %18 {offsets = [0, 0], sizes = [16, 128], strides = [1, 1]} : vector<16x256xf32> to vector<16x128xf32>
    %cst_16 = arith.constant dense<0.000000e+00> : vector<128x128xf32>
    %30 = tpu.matmul %25, %26, %cst_16 {dimension_numbers = #tpu.dot_dimension_numbers<[0], [0], [1], [1], [0, 1, 1, 1], [], []>} : vector<8x128xf32>, vector<8x128xf32>, vector<128x128xf32> -> vector<128x128xf32>
    %cst_17 = arith.constant dense<0xFF800000> : vector<128xf32>
    %31 = vector.multi_reduction <maximumf>, %30, %cst_17 [1] : vector<128x128xf32> to vector<128xf32>
    %32 = vector.shape_cast %31 : vector<128xf32> to vector<128x1xf32>
    %33 = vector.broadcast %32 : vector<128x1xf32> to vector<128x128xf32>
    %34 = arith.subf %30, %33 : vector<128x128xf32>
    %35 = math.exp %34 : vector<128x128xf32>
    %cst_18 = arith.constant dense<0.000000e+00> : vector<128xf32>
    %36 = vector.multi_reduction <add>, %35, %cst_18 [1] : vector<128x128xf32> to vector<128xf32>
    %37 = vector.shape_cast %36 : vector<128xf32> to vector<128x1xf32>
    %38 = tpu.reciprocal %37 {approx = true} : vector<128x1xf32> -> vector<128x1xf32>
    %39 = vector.broadcast %38 : vector<128x1xf32> to vector<128x128xf32>
    %40 = arith.mulf %35, %39 : vector<128x128xf32>
    %cst_19 = arith.constant dense<0.000000e+00> : vector<16x128xf32>
    %41 = tpu.matmul %27, %40, %cst_19 {dimension_numbers = #tpu.dot_dimension_numbers<[1], [1], [0], [0], [0, 0, 1, 0], [], []>} : vector<16x128xf32>, vector<128x128xf32>, vector<16x128xf32> -> vector<16x128xf32>
    %42 = arith.addf %41, %28 : vector<16x128xf32>
    %cst_20 = arith.constant dense<0.000000e+00> : vector<16x16xf32>
    %43 = tpu.matmul %29, %29, %cst_20 {dimension_numbers = #tpu.dot_dimension_numbers<[1], [1], [0], [0], [0, 0, 1, 0], [], []>} : vector<16x128xf32>, vector<16x128xf32>, vector<16x16xf32> -> vector<16x16xf32>
    %cst_21 = arith.constant dense<0x7F800000> : vector<16xf32>
    %44 = vector.multi_reduction <minimumf>, %43, %cst_21 [1] : vector<16x16xf32> to vector<16xf32>
    %45 = vector.shape_cast %44 : vector<16xf32> to vector<16x1xf32>
    %46 = vector.broadcast %45 : vector<16x1xf32> to vector<16x16xf32>
    %47 = arith.subf %46, %43 : vector<16x16xf32>
    %48 = math.exp %47 : vector<16x16xf32>
    %cst_22 = arith.constant dense<0.000000e+00> : vector<16xf32>
    %49 = vector.multi_reduction <add>, %48, %cst_22 [1] : vector<16x16xf32> to vector<16xf32>
    %50 = vector.shape_cast %49 : vector<16xf32> to vector<16x1xf32>
    %51 = tpu.reciprocal %50 {approx = true} : vector<16x1xf32> -> vector<16x1xf32>
    %52 = vector.broadcast %24 : f32 to vector<16x1xf32>
    %53 = arith.mulf %52, %51 : vector<16x1xf32>
    %54 = vector.broadcast %53 : vector<16x1xf32> to vector<16x16xf32>
    %55 = arith.mulf %48, %54 : vector<16x16xf32>
    %cst_23 = arith.constant dense<0.000000e+00> : vector<16x128xf32>
    %56 = tpu.matmul %55, %29, %cst_23 {dimension_numbers = #tpu.dot_dimension_numbers<[1], [0], [0], [1], [0, 0, 1, 1], [], []>} : vector<16x16xf32>, vector<16x128xf32>, vector<16x128xf32> -> vector<16x128xf32>
    %57 = arith.addf %56, %29 : vector<16x128xf32>
    %58 = arith.addf %42, %57 : vector<16x128xf32>
    %59 = vector.extract_strided_slice %23 {offsets = [0, 128], sizes = [8, 128], strides = [1, 1]} : vector<32x256xf32> to vector<8x128xf32>
    %60 = vector.extract_strided_slice %23 {offsets = [8, 128], sizes = [8, 128], strides = [1, 1]} : vector<32x256xf32> to vector<8x128xf32>
    %61 = vector.extract_strided_slice %23 {offsets = [16, 128], sizes = [16, 128], strides = [1, 1]} : vector<32x256xf32> to vector<16x128xf32>
    %62 = vector.extract_strided_slice %17 {offsets = [0, 128], sizes = [16, 128], strides = [1, 1]} : vector<16x256xf32> to vector<16x128xf32>
    %63 = vector.extract_strided_slice %18 {offsets = [0, 128], sizes = [16, 128], strides = [1, 1]} : vector<16x256xf32> to vector<16x128xf32>
    %cst_24 = arith.constant dense<0.000000e+00> : vector<128x128xf32>
    %64 = tpu.matmul %59, %60, %cst_24 {dimension_numbers = #tpu.dot_dimension_numbers<[0], [0], [1], [1], [0, 1, 1, 1], [], []>} : vector<8x128xf32>, vector<8x128xf32>, vector<128x128xf32> -> vector<128x128xf32>
    %cst_25 = arith.constant dense<0xFF800000> : vector<128xf32>
    %65 = vector.multi_reduction <maximumf>, %64, %cst_25 [1] : vector<128x128xf32> to vector<128xf32>
    %66 = vector.shape_cast %65 : vector<128xf32> to vector<128x1xf32>
    %67 = vector.broadcast %66 : vector<128x1xf32> to vector<128x128xf32>
    %68 = arith.subf %64, %67 : vector<128x128xf32>
    %69 = math.exp %68 : vector<128x128xf32>
    %cst_26 = arith.constant dense<0.000000e+00> : vector<128xf32>
    %70 = vector.multi_reduction <add>, %69, %cst_26 [1] : vector<128x128xf32> to vector<128xf32>
    %71 = vector.shape_cast %70 : vector<128xf32> to vector<128x1xf32>
    %72 = tpu.reciprocal %71 {approx = true} : vector<128x1xf32> -> vector<128x1xf32>
    %73 = vector.broadcast %72 : vector<128x1xf32> to vector<128x128xf32>
    %74 = arith.mulf %69, %73 : vector<128x128xf32>
    %cst_27 = arith.constant dense<0.000000e+00> : vector<16x128xf32>
    %75 = tpu.matmul %61, %74, %cst_27 {dimension_numbers = #tpu.dot_dimension_numbers<[1], [1], [0], [0], [0, 0, 1, 0], [], []>} : vector<16x128xf32>, vector<128x128xf32>, vector<16x128xf32> -> vector<16x128xf32>
    %76 = arith.addf %75, %62 : vector<16x128xf32>
    %cst_28 = arith.constant dense<0.000000e+00> : vector<16x16xf32>
    %77 = tpu.matmul %63, %63, %cst_28 {dimension_numbers = #tpu.dot_dimension_numbers<[1], [1], [0], [0], [0, 0, 1, 0], [], []>} : vector<16x128xf32>, vector<16x128xf32>, vector<16x16xf32> -> vector<16x16xf32>
    %cst_29 = arith.constant dense<0x7F800000> : vector<16xf32>
    %78 = vector.multi_reduction <minimumf>, %77, %cst_29 [1] : vector<16x16xf32> to vector<16xf32>
    %79 = vector.shape_cast %78 : vector<16xf32> to vector<16x1xf32>
    %80 = vector.broadcast %79 : vector<16x1xf32> to vector<16x16xf32>
    %81 = arith.subf %80, %77 : vector<16x16xf32>
    %82 = math.exp %81 : vector<16x16xf32>
    %cst_30 = arith.constant dense<0.000000e+00> : vector<16xf32>
    %83 = vector.multi_reduction <add>, %82, %cst_30 [1] : vector<16x16xf32> to vector<16xf32>
    %84 = vector.shape_cast %83 : vector<16xf32> to vector<16x1xf32>
    %85 = tpu.reciprocal %84 {approx = true} : vector<16x1xf32> -> vector<16x1xf32>
    %86 = vector.broadcast %24 : f32 to vector<16x1xf32>
    %87 = arith.mulf %86, %85 : vector<16x1xf32>
    %88 = vector.broadcast %87 : vector<16x1xf32> to vector<16x16xf32>
    %89 = arith.mulf %82, %88 : vector<16x16xf32>
    %cst_31 = arith.constant dense<0.000000e+00> : vector<16x128xf32>
    %90 = tpu.matmul %89, %63, %cst_31 {dimension_numbers = #tpu.dot_dimension_numbers<[1], [0], [0], [1], [0, 0, 1, 1], [], []>} : vector<16x16xf32>, vector<16x128xf32>, vector<16x128xf32> -> vector<16x128xf32>
    %91 = arith.addf %90, %63 : vector<16x128xf32>
    %92 = arith.addf %76, %91 : vector<16x128xf32>
    %93 = tpu.concatenate %58, %92 in 1 : vector<16x128xf32>, vector<16x128xf32> -> vector<16x256xf32>
    %c0_32 = arith.constant 0 : index
    %c0_33 = arith.constant 0 : index
    %94 = vector.load %arg6[%c0_32, %c0_33] : memref<8x16xf32, #tpu.memory_space<vmem>>, vector<8x16xf32>
    %cst_34 = arith.constant dense<0.000000e+00> : vector<8x256xf32>
    %95 = tpu.matmul %94, %93, %cst_34 {dimension_numbers = #tpu.dot_dimension_numbers<[1], [0], [0], [1], [0, 0, 1, 1], [], []>} : vector<8x16xf32>, vector<16x256xf32>, vector<8x256xf32> -> vector<8x256xf32>
    %c0_35 = arith.constant 0 : index
    %c0_36 = arith.constant 0 : index
    %96 = vector.load %arg7[%c0_35, %c0_36] : memref<8x1xf32, #tpu.memory_space<vmem>>, vector<8x1xf32>
    %97 = vector.broadcast %96 : vector<8x1xf32> to vector<8x256xf32>
    %98 = arith.addf %95, %97 : vector<8x256xf32>
    %c0_37 = arith.constant 0 : index
    %c0_38 = arith.constant 0 : index
    %c0_39 = arith.constant 0 : index
    %99 = vector.load %arg9[%c0_37, %c0_38, %c0_39] : memref<1x8x256xf32, #tpu.memory_space<vmem>>, vector<1x8x256xf32>
    %100 = vector.shape_cast %99 : vector<1x8x256xf32> to vector<8x256xf32>
    %101 = vector.shape_cast %98 : vector<8x256xf32> to vector<1x8x256xf32>
    tpu.vector_store %arg9[%c0_37, %c0_38, %c0_39], %101 {strides = array<i32>} : memref<1x8x256xf32, #tpu.memory_space<vmem>>, vector<1x8x256xf32>,
    return
  }
  func.func @transform_0(%arg0: i32) -> (i32, i32, i32) {
    %c0_i32 = arith.constant 0 : i32
    %c0_i32_0 = arith.constant 0 : i32
    %c0_i32_1 = arith.constant 0 : i32
    return %arg0, %c0_i32, %c0_i32_0 : i32, i32, i32
  }
  func.func @transform_1(%arg0: i32) -> (i32, i32) {
    %c0_i32 = arith.constant 0 : i32
    %c0_i32_0 = arith.constant 0 : i32
    %c0_i32_1 = arith.constant 0 : i32
    return %c0_i32, %c0_i32_0 : i32, i32
  }
  func.func @transform_2(%arg0: i32) -> (i32, i32) {
    %c0_i32 = arith.constant 0 : i32
    %c0_i32_0 = arith.constant 0 : i32
    %c0_i32_1 = arith.constant 0 : i32
    return %c0_i32, %c0_i32_0 : i32, i32
  }
  func.func @transform_3(%arg0: i32) -> (i32, i32) {
    %c0_i32 = arith.constant 0 : i32
    %c0_i32_0 = arith.constant 0 : i32
    %c0_i32_1 = arith.constant 0 : i32
    return %c0_i32, %c0_i32_0 : i32, i32
  }
  func.func @transform_4(%arg0: i32) -> (i32, i32) {
    %c0_i32 = arith.constant 0 : i32
    %c0_i32_0 = arith.constant 0 : i32
    %c0_i32_1 = arith.constant 0 : i32
    return %c0_i32, %c0_i32_0 : i32, i32
  }
  func.func @transform_5(%arg0: i32) -> (i32, i32) {
    %c0_i32 = arith.constant 0 : i32
    %c0_i32_0 = arith.constant 0 : i32
    %c0_i32_1 = arith.constant 0 : i32
    return %c0_i32, %c0_i32_0 : i32, i32
  }
  func.func @transform_6(%arg0: i32) -> (i32, i32) {
    %c0_i32 = arith.constant 0 : i32
    %c0_i32_0 = arith.constant 0 : i32
    %c0_i32_1 = arith.constant 0 : i32
    return %c0_i32, %c0_i32_0 : i32, i32
  }
  func.func @transform_7(%arg0: i32) -> i32 {
    %c0_i32 = arith.constant 0 : i32
    %c0_i32_0 = arith.constant 0 : i32
    return %c0_i32 : i32
  }
  func.func @transform_8(%arg0: i32) -> (i32, i32, i32) {
    %c0_i32 = arith.constant 0 : i32
    %c0_i32_0 = arith.constant 0 : i32
    %c0_i32_1 = arith.constant 0 : i32
    return %arg0, %c0_i32, %c0_i32_0 : i32, i32, i32
  }
}

</mosaic_0001>

<llo_original>
// kernel: tpu_custom_call.1
$region0: #{tpu_custom_call.1}
  #allocation0 [shape = 'u32[]', space=smem, size = 0x4, offset = 0x4, fixed_abs, tag = 'smem constant byte address 0x4 - core index']
  #allocation1 [shape = 'u32[72,128]{1,0:T(1,128)}', space=vmem, size = 0x9000, scoped, tag = 'internal scratch']
  #allocation2 [shape = 'f32[1]{0:T(128)S(6)}', space=smem, size = 0x200, scoped, tag = 'scoped memory for tpu_custom_call.1']
  %s0 = inlined_call_operand.hbm [shape: bf16[2,144,256], index: 0, kind: input, shape index: {}]
  %s1 = inlined_call_operand.vmem [shape: bf16[32,144], index: 1, kind: input, shape index: {}]
  %s2 = inlined_call_operand.vmem [shape: f32[32,1], index: 2, kind: input, shape index: {}]
  %s3 = inlined_call_operand.vmem [shape: f32[32,16], index: 3, kind: input, shape index: {}]
  %s4 = inlined_call_operand.vmem [shape: f32[32,1], index: 4, kind: input, shape index: {}]
  %s5 = inlined_call_operand.vmem [shape: f32[8,16], index: 5, kind: input, shape index: {}]
  %s6 = inlined_call_operand.vmem [shape: f32[8,1], index: 6, kind: input, shape index: {}]
  %s7 = inlined_call_operand.<no memory space> [shape: f32[1], index: 7, kind: input, shape index: {}]
  %s8 = inlined_call_operand.hbm [shape: f32[2,8,256], index: 8, kind: output, shape index: {}]
  %s9 = sld [smem:[#allocation0]]
  $region69: #{tpu_custom_call.1} parent=0
    _
  %s11 = ssub.s32 1, %s9
  %s12 = scalar_select 0, %s11, %s9
  %13 = sst [smem:[#allocation2]] %s7
  $region1: #{tpu_custom_call.1} parent=0
    #allocation3 [shape = 'u8[147456]{0}', space=vmem, size = 0x24000, scoped, tag = 'input window, operand 0']
    #allocation4 [shape = 's32[2]{0}', space=sflag, size = 0x8, scoped, tag = 'scoped memory for tpu_custom_call.1']
    #allocation5 [shape = 's32[2]{0}', space=sflag, size = 0x8, scoped, tag = 'scoped memory for tpu_custom_call.1']
    #allocation6 [shape = 'u8[16384]{0}', space=vmem, size = 0x4000, scoped, tag = 'output window, operand 0']
    %14 = vsyncpa [#allocation4], 0
    %s15 = scalar_lea.sflag [#allocation4], 1
    %16 = vsyncpa %s15, 0
    %17 = vsyncpa [#allocation5], 0
    %s18 = scalar_lea.sflag [#allocation5], 1
    %19 = vsyncpa %s18, 0
    loop: start=0, step=1, limit=4
    $region2: #{tpu_custom_call.1} parent=1 // loop_pre_header
      _
    $region3: #{tpu_custom_call.1} parent=1 // loop_header
      %s21 = sphi 0, %s25
      %p22 = scmp.ge.s32.totalorder %s21, 4
      %s31 = sphi 0, %s33
      %s34 = sphi 0, %s31
      %s35 = sphi 0, %s34
      %s51 = sphi 0, %s35
      %s55 = sphi 0, %s55
      %s57 = sphi 0, %s55
      %s58 = sphi 0, %s57
      %s72 = sphi 0, %s58
      %s76 = sphi 0, %s76
      %s78 = sphi 0, %s76
      %s79 = sphi 0, %s78
      %s93 = sphi 0, %s79
      %s97 = sphi 0, %s97
      %s99 = sphi 0, %s97
      %s100 = sphi 0, %s99
      %s114 = sphi 0, %s100
      %s118 = sphi 0, %s118
      %s120 = sphi 0, %s118
      %s121 = sphi 0, %s120
      %s135 = sphi 0, %s121
      %s139 = sphi 0, %s139
      %s141 = sphi 0, %s139
      %s142 = sphi 0, %s141
      %s156 = sphi 0, %s142
      %s160 = sphi 0, %s160
      %s162 = sphi 0, %s160
      %s163 = sphi 0, %s162
      %s177 = sphi 0, %s163
      %s181 = sphi 0, %s181
      %s183 = sphi 0, %s181
      %s184 = sphi 0, %s183
      %s198 = sphi 0, %s184
      %s204 = sphi 0, %s206
      %s207 = sphi 0, %s204
      %s208 = sphi 0, %s207
      %s224 = sphi 0, %s208
    $region4: #{tpu_custom_call.1} parent=1 // loop_header_branch
      %24 = sbr.rel (%p22) target = $region8
    $region5: #{tpu_custom_call.1} parent=1 // loop_body
      %s26 = ssub.s32 %s21, 1
      %s27 = ssub.s32 %s21, 2
      %s28 = sadd.s32 %s21, 1
      %s29 = ssub.s32 %s21, %s28
      %p30 = scmp.eq.s32.totalorder %s29, 0
      %s32 = sadd.s32 %s31, 1
      %s33 = scalar_select %p30, %s31, %s32
      %p36 = pneg %p30
      %p37 = scmp.eq.s32.totalorder %s21, 1
      %p38 = por %p36, %p37
      %p39 = scmp.ne.s32.totalorder %s31, %s34
      %p40 = scmp.eq.s32.totalorder %s21, 0
      %p41 = por %p39, %p40
      %p42 = scmp.ne.s32.totalorder %s31, %s34
      %p43 = scmp.eq.s32.totalorder %s26, 1
      %p44 = por %p42, %p43
      %p45 = scmp.ne.s32.totalorder %s34, %s35
      %p46 = scmp.eq.s32.totalorder %s26, 0
      %p47 = por %p45, %p46
      %p48 = scmp.ne.s32.totalorder %s34, %s35
      %p49 = scmp.eq.s32.totalorder %s27, 1
      %p50 = por %p48, %p49
      %p52 = scmp.ne.s32.totalorder %s35, %s51
      %p53 = scmp.eq.s32.totalorder %s27, 0
      %p54 = por %p52, %p53
      %s56 = sadd.s32 %s55, 1
      %p59 = scmp.eq.s32.totalorder %s21, 1
      %p60 = scmp.ne.s32.totalorder %s55, %s57
      %p61 = scmp.eq.s32.totalorder %s21, 0
      %p62 = por %p60, %p61
      %p63 = scmp.ne.s32.totalorder %s55, %s57
      %p64 = scmp.eq.s32.totalorder %s26, 1
      %p65 = por %p63, %p64
      %p66 = scmp.ne.s32.totalorder %s57, %s58
      %p67 = scmp.eq.s32.totalorder %s26, 0
      %p68 = por %p66, %p67
      %p69 = scmp.ne.s32.totalorder %s57, %s58
      %p70 = scmp.eq.s32.totalorder %s27, 1
      %p71 = por %p69, %p70
      %p73 = scmp.ne.s32.totalorder %s58, %s72
      %p74 = scmp.eq.s32.totalorder %s27, 0
      %p75 = por %p73, %p74
      %s77 = sadd.s32 %s76, 1
      %p80 = scmp.eq.s32.totalorder %s21, 1
      %p81 = scmp.ne.s32.totalorder %s76, %s78
      %p82 = scmp.eq.s32.totalorder %s21, 0
      %p83 = por %p81, %p82
      %p84 = scmp.ne.s32.totalorder %s76, %s78
      %p85 = scmp.eq.s32.totalorder %s26, 1
      %p86 = por %p84, %p85
      %p87 = scmp.ne.s32.totalorder %s78, %s79
      %p88 = scmp.eq.s32.totalorder %s26, 0
      %p89 = por %p87, %p88
      %p90 = scmp.ne.s32.totalorder %s78, %s79
      %p91 = scmp.eq.s32.totalorder %s27, 1
      %p92 = por %p90, %p91
      %p94 = scmp.ne.s32.totalorder %s79, %s93
      %p95 = scmp.eq.s32.totalorder %s27, 0
      %p96 = por %p94, %p95
      %s98 = sadd.s32 %s97, 1
      %p101 = scmp.eq.s32.totalorder %s21, 1
      %p102 = scmp.ne.s32.totalorder %s97, %s99
      %p103 = scmp.eq.s32.totalorder %s21, 0
      %p104 = por %p102, %p103
      %p105 = scmp.ne.s32.totalorder %s97, %s99
      %p106 = scmp.eq.s32.totalorder %s26, 1
      %p107 = por %p105, %p106
      %p108 = scmp.ne.s32.totalorder %s99, %s100
      %p109 = scmp.eq.s32.totalorder %s26, 0
      %p110 = por %p108, %p109
      %p111 = scmp.ne.s32.totalorder %s99, %s100
      %p112 = scmp.eq.s32.totalorder %s27, 1
      %p113 = por %p111, %p112
      %p115 = scmp.ne.s32.totalorder %s100, %s114
      %p116 = scmp.eq.s32.totalorder %s27, 0
      %p117 = por %p115, %p116
      %s119 = sadd.s32 %s118, 1
      %p122 = scmp.eq.s32.totalorder %s21, 1
      %p123 = scmp.ne.s32.totalorder %s118, %s120
      %p124 = scmp.eq.s32.totalorder %s21, 0
      %p125 = por %p123, %p124
      %p126 = scmp.ne.s32.totalorder %s118, %s120
      %p127 = scmp.eq.s32.totalorder %s26, 1
      %p128 = por %p126, %p127
      %p129 = scmp.ne.s32.totalorder %s120, %s121
      %p130 = scmp.eq.s32.totalorder %s26, 0
      %p131 = por %p129, %p130
      %p132 = scmp.ne.s32.totalorder %s120, %s121
      %p133 = scmp.eq.s32.totalorder %s27, 1
      %p134 = por %p132, %p133
      %p136 = scmp.ne.s32.totalorder %s121, %s135
      %p137 = scmp.eq.s32.totalorder %s27, 0
      %p138 = por %p136, %p137
      %s140 = sadd.s32 %s139, 1
      %p143 = scmp.eq.s32.totalorder %s21, 1
      %p144 = scmp.ne.s32.totalorder %s139, %s141
      %p145 = scmp.eq.s32.totalorder %s21, 0
      %p146 = por %p144, %p145
      %p147 = scmp.ne.s32.totalorder %s139, %s141
      %p148 = scmp.eq.s32.totalorder %s26, 1
      %p149 = por %p147, %p148
      %p150 = scmp.ne.s32.totalorder %s141, %s142
      %p151 = scmp.eq.s32.totalorder %s26, 0
      %p152 = por %p150, %p151
      %p153 = scmp.ne.s32.totalorder %s141, %s142
      %p154 = scmp.eq.s32.totalorder %s27, 1
      %p155 = por %p153, %p154
      %p157 = scmp.ne.s32.totalorder %s142, %s156
      %p158 = scmp.eq.s32.totalorder %s27, 0
      %p159 = por %p157, %p158
      %s161 = sadd.s32 %s160, 1
      %p164 = scmp.eq.s32.totalorder %s21, 1
      %p165 = scmp.ne.s32.totalorder %s160, %s162
      %p166 = scmp.eq.s32.totalorder %s21, 0
      %p167 = por %p165, %p166
      %p168 = scmp.ne.s32.totalorder %s160, %s162
      %p169 = scmp.eq.s32.totalorder %s26, 1
      %p170 = por %p168, %p169
      %p171 = scmp.ne.s32.totalorder %s162, %s163
      %p172 = scmp.eq.s32.totalorder %s26, 0
      %p173 = por %p171, %p172
      %p174 = scmp.ne.s32.totalorder %s162, %s163
      %p175 = scmp.eq.s32.totalorder %s27, 1
      %p176 = por %p174, %p175
      %p178 = scmp.ne.s32.totalorder %s163, %s177
      %p179 = scmp.eq.s32.totalorder %s27, 0
      %p180 = por %p178, %p179
      %s182 = sadd.s32 %s181, 1
      %p185 = scmp.eq.s32.totalorder %s21, 1
      %p186 = scmp.ne.s32.totalorder %s181, %s183
      %p187 = scmp.eq.s32.totalorder %s21, 0
      %p188 = por %p186, %p187
      %p189 = scmp.ne.s32.totalorder %s181, %s183
      %p190 = scmp.eq.s32.totalorder %s26, 1
      %p191 = por %p189, %p190
      %p192 = scmp.ne.s32.totalorder %s183, %s184
      %p193 = scmp.eq.s32.totalorder %s26, 0
      %p194 = por %p192, %p193
      %p195 = scmp.ne.s32.totalorder %s183, %s184
      %p196 = scmp.eq.s32.totalorder %s27, 1
      %p197 = por %p195, %p196
      %p199 = scmp.ne.s32.totalorder %s184, %s198
      %p200 = scmp.eq.s32.totalorder %s27, 0
      %p201 = por %p199, %p200
      %s202 = ssub.s32 %s21, %s28
      %p203 = scmp.eq.s32.totalorder %s202, 0
      %s205 = sadd.s32 %s204, 1
      %s206 = scalar_select %p203, %s204, %s205
      %p209 = pneg %p203
      %p210 = scmp.eq.s32.totalorder %s21, 1
      %p211 = por %p209, %p210
      %p212 = scmp.ne.s32.totalorder %s204, %s207
      %p213 = scmp.eq.s32.totalorder %s21, 0
      %p214 = por %p212, %p213
      %p215 = scmp.ne.s32.totalorder %s204, %s207
      %p216 = scmp.eq.s32.totalorder %s26, 1
      %p217 = por %p215, %p216
      %p218 = scmp.ne.s32.totalorder %s207, %s208
      %p219 = scmp.eq.s32.totalorder %s26, 0
      %p220 = por %p218, %p219
      %p221 = scmp.ne.s32.totalorder %s207, %s208
      %p222 = scmp.eq.s32.totalorder %s27, 1
      %p223 = por %p221, %p222
      %p225 = scmp.ne.s32.totalorder %s208, %s224
      %p226 = scmp.eq.s32.totalorder %s27, 0
      %p227 = por %p225, %p226
      %p228 = scmp.le.s32.totalorder 1, %s21
      %p229 = scmp.lt.s32.totalorder %s21, 3
      %p230 = pnand %p228, %p229
      %p231 = pneg %p230
      // Predicated region
      $region9: #{tpu_custom_call.1} parent=5 // pred_check
        _
      $region10: #{tpu_custom_call.1} parent=5 // pred_check_branch
        %233 = sbr.rel (%p230) target = $region12
      $region11: #{tpu_custom_call.1} parent=5 // pred_region
        %s234 = ssub.s32 %s21, 1
        // Predicated region
        $region13: #{tpu_custom_call.1} parent=11 // pred_check
          %p235 = pneg %p68
        $region14: #{tpu_custom_call.1} parent=11 // pred_check_branch
          %237 = sbr.rel (%p235) target = $region16
        $region15: #{tpu_custom_call.1} parent=11 // pred_region
          _
        $region16: #{tpu_custom_call.1} parent=11 // pred_fallthru
          _
        // Predicated region
        $region17: #{tpu_custom_call.1} parent=11 // pred_check
          %p238 = pneg %p89
        $region18: #{tpu_custom_call.1} parent=11 // pred_check_branch
          %240 = sbr.rel (%p238) target = $region20
        $region19: #{tpu_custom_call.1} parent=11 // pred_region
          _
        $region20: #{tpu_custom_call.1} parent=11 // pred_fallthru
          _
        // Predicated region
        $region21: #{tpu_custom_call.1} parent=11 // pred_check
          %p241 = pneg %p110
        $region22: #{tpu_custom_call.1} parent=11 // pred_check_branch
          %243 = sbr.rel (%p241) target = $region24
        $region23: #{tpu_custom_call.1} parent=11 // pred_region
          _
        $region24: #{tpu_custom_call.1} parent=11 // pred_fallthru
          _
        // Predicated region
        $region25: #{tpu_custom_call.1} parent=11 // pred_check
          %p244 = pneg %p131
        $region26: #{tpu_custom_call.1} parent=11 // pred_check_branch
          %246 = sbr.rel (%p244) target = $region28
        $region27: #{tpu_custom_call.1} parent=11 // pred_region
          _
        $region28: #{tpu_custom_call.1} parent=11 // pred_fallthru
          _
        // Predicated region
        $region29: #{tpu_custom_call.1} parent=11 // pred_check
          %p247 = pneg %p152
        $region30: #{tpu_custom_call.1} parent=11 // pred_check_branch
          %249 = sbr.rel (%p247) target = $region32
        $region31: #{tpu_custom_call.1} parent=11 // pred_region
          _
        $region32: #{tpu_custom_call.1} parent=11 // pred_fallthru
          _
        // Predicated region
        $region33: #{tpu_custom_call.1} parent=11 // pred_check
          %p250 = pneg %p173
        $region34: #{tpu_custom_call.1} parent=11 // pred_check_branch
          %252 = sbr.rel (%p250) target = $region36
        $region35: #{tpu_custom_call.1} parent=11 // pred_region
          _
        $region36: #{tpu_custom_call.1} parent=11 // pred_fallthru
          _
        // Predicated region
        $region37: #{tpu_custom_call.1} parent=11 // pred_check
          %p253 = pneg %p194
        $region38: #{tpu_custom_call.1} parent=11 // pred_check_branch
          %255 = sbr.rel (%p253) target = $region40
        $region39: #{tpu_custom_call.1} parent=11 // pred_region
          _
        $region40: #{tpu_custom_call.1} parent=11 // pred_fallthru
          _
      $region12: #{tpu_custom_call.1} parent=5 // pred_fallthru
        _
      %p256 = scmp.lt.s32.totalorder %s21, 2
      // Predicated region
      $region41: #{tpu_custom_call.1} parent=5 // pred_check
        %p257 = pneg %p256
      $region42: #{tpu_custom_call.1} parent=5 // pred_check_branch
        %259 = sbr.rel (%p257) target = $region44
      $region43: #{tpu_custom_call.1} parent=5 // pred_region
        // Predicated region
        $region45: #{tpu_custom_call.1} parent=43 // pred_check
          %p260 = pneg %p41
        $region46: #{tpu_custom_call.1} parent=43 // pred_check_branch
          %262 = sbr.rel (%p260) target = $region48
        $region47: #{tpu_custom_call.1} parent=43 // pred_region
          %s263 = sand.u32 %s31, 1
          %s264 = scalar_lea.sflag [#allocation4], %s263
          %s265 = sand.u32 %s31, 1
          %s266 = smul.addr %s265, 144
          %s267 = scalar_lea.vmem [#allocation3], %s266
          %269 = vsyncadd %s264, 0
          %s270 = smul.addr %s21, 36
          %s271 = smul.addr %s270, 4
          %s272 = scalar_lea.hbm %s0, %s271
          %s273 = sshll.u32 %s272, 4
          %s274 = int_to_ptr.hbm [resolvable:$true] %s273
          %s275 = sshll.u32 %s267, 4
          %s276 = int_to_ptr.vmem [resolvable:$true] %s275
          %281 = dma.hbm_to_vmem [thread:$0]  %s274, 2304, %s276, %s264, 128, 128, 8
        $region48: #{tpu_custom_call.1} parent=43 // pred_fallthru
          _
      $region44: #{tpu_custom_call.1} parent=5 // pred_fallthru
        _
      %p282 = scmp.le.s32.totalorder 1, %s21
      %p283 = scmp.lt.s32.totalorder %s21, 3
      %p284 = pnand %p282, %p283
      %p285 = pneg %p284
      // Predicated region
      $region49: #{tpu_custom_call.1} parent=5 // pred_check
        _
      $region50: #{tpu_custom_call.1} parent=5 // pred_check_branch
        %287 = sbr.rel (%p284) target = $region52
      $region51: #{tpu_custom_call.1} parent=5 // pred_region
        %s288 = ssub.s32 %s21, 1
        %s289 = sand.u32 %s34, 1
        %s290 = scalar_lea.sflag [#allocation4], %s289
        %s291 = sand.u32 %s34, 1
        %s292 = smul.addr %s291, 144
        %s293 = scalar_lea.vmem [#allocation3], %s292
        // Predicated region
        $region53: #{tpu_custom_call.1} parent=51 // pred_check
          %p294 = pneg %p47
        $region54: #{tpu_custom_call.1} parent=51 // pred_check_branch
          %296 = sbr.rel (%p294) target = $region56
        $region55: #{tpu_custom_call.1} parent=51 // pred_region
          %298 = dma.done %s290, 2304
        $region56: #{tpu_custom_call.1} parent=51 // pred_fallthru
          _
        %s299 = sand.u32 %s34, 1
        %s300 = scalar_lea.sflag [#allocation4], %s299
        %s301 = sand.u32 %s34, 1
        %s302 = smul.addr %s301, 144
        %s303 = scalar_lea.vmem [#allocation3], %s302
        %p304 = pneg %p47
        %p305 = pneg %p44
        %p306 = pneg %p68
        %p307 = pneg %p65
        %p308 = pneg %p89
        %p309 = pneg %p86
        %p310 = pneg %p110
        %p311 = pneg %p107
        %p312 = pneg %p131
        %p313 = pneg %p128
        %p314 = pneg %p152
        %p315 = pneg %p149
        %p316 = pneg %p173
        %p317 = pneg %p170
        %p318 = pneg %p194
        %p319 = pneg %p191
        %p320 = pneg %p220
        %p321 = pneg %p217
        %s322 = sand.u32 %s207, 1
        %s323 = scalar_lea.sflag [#allocation5], %s322
        %s324 = sand.u32 %s207, 1
        %s325 = smul.addr %s324, 16
        %s326 = scalar_lea.vmem [#allocation6], %s325
        %v328 = vld [vmem:[%s1] sm:$0xff]
        %v329 = vld [vmem:[%s1 + $0x8] sm:$0xff]
        %v330 = vld [vmem:[%s1 + $0x10] sm:$0xff]
        %v331 = vld [vmem:[%s1 + $0x18] sm:$0xff]
        %v332 = vld [vmem:[%s293] sm:$0xff]
        %v333 = vld [vmem:[%s293 + $0x8] sm:$0xff]
        %v334 = vld [vmem:[%s293 + $0x10] sm:$0xff]
        %v335 = vld [vmem:[%s293 + $0x18] sm:$0xff]
        %v336 = vld [vmem:[%s293 + $0x20] sm:$0xff]
        %v337 = vld [vmem:[%s293 + $0x28] sm:$0xff]
        %v338 = vld [vmem:[%s293 + $0x30] sm:$0xff]
        %v339 = vld [vmem:[%s293 + $0x38] sm:$0xff]
        %v340 = vld [vmem:[%s293 + $0x40] sm:$0xff]
        %v341 = vld [vmem:[%s293 + $0x48] sm:$0xff]
        %v342 = vld [vmem:[%s293 + $0x50] sm:$0xff]
        %v343 = vld [vmem:[%s293 + $0x58] sm:$0xff]
        %v344 = vld [vmem:[%s293 + $0x60] sm:$0xff]
        %v345 = vld [vmem:[%s293 + $0x68] sm:$0xff]
        %v346 = vld [vmem:[%s293 + $0x70] sm:$0xff]
        %v347 = vld [vmem:[%s293 + $0x78] sm:$0xff]
        %v348 = vld [vmem:[%s293 + $0x80] sm:$0xff]
        %v349 = vld [vmem:[%s293 + $0x88] sm:$0xff]
        %v350 = vld [vmem:[%s2] sm:$0xff]
        %v351 = vld [vmem:[%s2 + $0x8] sm:$0xff]
        %v352 = vld [vmem:[%s2 + $0x10] sm:$0xff]
        %v353 = vld [vmem:[%s2 + $0x18] sm:$0xff]
        %355 = vset.pattern.permute.xlu0 0
        %356 = vperm.xlu0 %355, %v350
        %v357 = vpop.permute.xlu0 %356
        %360 = vset.pattern.permute.xlu0 0
        %361 = vperm.xlu0 %360, %v351
        %v362 = vpop.permute.xlu0 %361
        %365 = vset.pattern.permute.xlu0 0
        %366 = vperm.xlu0 %365, %v352
        %v367 = vpop.permute.xlu0 %366
        %370 = vset.pattern.permute.xlu0 0
        %371 = vperm.xlu0 %370, %v353
        %v372 = vpop.permute.xlu0 %371
        %v378 = vunpack.c.l.b16 %v328
        %v379 = vunpack.c.h.b16 %v328
        %v380 = vunpack.c.l.b16 %v329
        %v381 = vunpack.c.h.b16 %v329
        %v382 = vunpack.c.l.b16 %v330
        %v383 = vunpack.c.h.b16 %v330
        %v384 = vunpack.c.l.b16 %v331
        %v385 = vunpack.c.h.b16 %v331
        %v386 = vpack.c.b16 %v380, %v378
        %v387 = vpack.c.b16 %v381, %v379
        %v388 = vpack.c.b16 %v384, %v382
        %v389 = vpack.c.b16 %v385, %v383
        %v410 = vunpack.c.l.b16 %v332
        %v411 = vunpack.c.h.b16 %v332
        %v412 = vunpack.c.l.b16 %v333
        %v413 = vunpack.c.h.b16 %v333
        %v414 = vunpack.c.l.b16 %v334
        %v415 = vunpack.c.h.b16 %v334
        %v416 = vunpack.c.l.b16 %v335
        %v417 = vunpack.c.h.b16 %v335
        %v418 = vunpack.c.l.b16 %v336
        %v419 = vunpack.c.h.b16 %v336
        %v420 = vunpack.c.l.b16 %v337
        %v421 = vunpack.c.h.b16 %v337
        %v422 = vunpack.c.l.b16 %v338
        %v423 = vunpack.c.h.b16 %v338
        %v424 = vunpack.c.l.b16 %v339
        %v425 = vunpack.c.h.b16 %v339
        %v426 = vunpack.c.l.b16 %v340
        %v427 = vunpack.c.h.b16 %v340
        %v428 = vunpack.c.l.b16 %v341
        %v429 = vunpack.c.h.b16 %v341
        %v430 = vunpack.c.l.b16 %v342
        %v431 = vunpack.c.h.b16 %v342
        %v432 = vunpack.c.l.b16 %v343
        %v433 = vunpack.c.h.b16 %v343
        %v434 = vunpack.c.l.b16 %v344
        %v435 = vunpack.c.h.b16 %v344
        %v436 = vunpack.c.l.b16 %v345
        %v437 = vunpack.c.h.b16 %v345
        %v438 = vunpack.c.l.b16 %v346
        %v439 = vunpack.c.h.b16 %v346
        %v440 = vunpack.c.l.b16 %v347
        %v441 = vunpack.c.h.b16 %v347
        %v442 = vunpack.c.l.b16 %v348
        %v443 = vunpack.c.h.b16 %v348
        %v444 = vunpack.c.l.b16 %v349
        %v445 = vunpack.c.h.b16 %v349
        %v446 = vpack.c.b16 %v412, %v410
        %v447 = vpack.c.b16 %v413, %v411
        %v448 = vpack.c.b16 %v416, %v414
        %v449 = vpack.c.b16 %v417, %v415
        %v450 = vpack.c.b16 %v420, %v418
        %v451 = vpack.c.b16 %v421, %v419
        %v452 = vpack.c.b16 %v424, %v422
        %v453 = vpack.c.b16 %v425, %v423
        %v454 = vpack.c.b16 %v428, %v426
        %v455 = vpack.c.b16 %v429, %v427
        %v456 = vpack.c.b16 %v432, %v430
        %v457 = vpack.c.b16 %v433, %v431
        %v458 = vpack.c.b16 %v436, %v434
        %v459 = vpack.c.b16 %v437, %v435
        %v460 = vpack.c.b16 %v440, %v438
        %v461 = vpack.c.b16 %v441, %v439
        %v462 = vpack.c.b16 %v444, %v442
        %v463 = vpack.c.b16 %v445, %v443
        %vm482 = vcmask 130048
        %v484 = vsel %vm482, %v387, 0
        %v487 = vsel %vm482, %v389, 0
        %489 = vmatpush.bf16.msra.mxu0 %v460
        %490 = vmatpush.bf16.msra.mxu0 %v458
        %491 = vmatpush.bf16.msra.mxu0 %v456
        %492 = vmatpush.bf16.msra.mxu0 %v454
        %493 = vmatpush.bf16.msra.mxu0 %v452
        %494 = vmatpush.bf16.msra.mxu0 %v450
        %495 = vmatpush.bf16.msra.mxu0 %v448
        %496 = vmatpush.bf16.msra.mxu0 %v446
        %497 = vmatmul.bf16.gmra.mxu0 %v386
        %v498 = vpop.f32.mrf.mxu0
        %v499 = vadd.f32 %v357, %v498
        %v500 = vpop.f32.mrf.mxu0
        %v501 = vadd.f32 %v362, %v500
        %502 = vmatmul.bf16.gmra.mxu0 %v388
        %v503 = vpop.f32.mrf.mxu0
        %v504 = vadd.f32 %v367, %v503
        %v505 = vpop.f32.mrf.mxu0
        %v506 = vadd.f32 %v372, %v505
        %507 = vdwg.mxu0
        %508 = vmatpush.bf16.msra.mxu0 0
        %509 = vmatpush.bf16.msra.mxu0 0
        %510 = vmatpush.bf16.msra.mxu0 0
        %511 = vmatpush.bf16.msra.mxu0 0
        %512 = vmatpush.bf16.msra.mxu0 0
        %513 = vmatpush.bf16.msra.mxu0 0
        %514 = vmatpush.bf16.msra.mxu0 0
        %515 = vmatpush.bf16.msra.mxu0 %v462
        %516 = vmatmul.bf16.gmra.mxu0 %v484
        %v517 = vpop.f32.mrf.mxu0
        %v518 = vadd.f32 %v499, %v517
        %v519 = vpop.f32.mrf.mxu0
        %v520 = vadd.f32 %v501, %v519
        %521 = vmatmul.bf16.gmra.mxu0 %v487
        %v522 = vpop.f32.mrf.mxu0
        %v523 = vadd.f32 %v504, %v522
        %v524 = vpop.f32.mrf.mxu0
        %v525 = vadd.f32 %v506, %v524
        %526 = vdwg.mxu0
        %527 = vmatpush.bf16.msra.mxu0 %v461
        %528 = vmatpush.bf16.msra.mxu0 %v459
        %529 = vmatpush.bf16.msra.mxu0 %v457
        %530 = vmatpush.bf16.msra.mxu0 %v455
        %531 = vmatpush.bf16.msra.mxu0 %v453
        %532 = vmatpush.bf16.msra.mxu0 %v451
        %533 = vmatpush.bf16.msra.mxu0 %v449
        %534 = vmatpush.bf16.msra.mxu0 %v447
        %535 = vmatmul.bf16.gmra.mxu0 %v386
        %v536 = vpop.f32.mrf.mxu0
        %v537 = vadd.f32 %v357, %v536
        %v538 = vpop.f32.mrf.mxu0
        %v539 = vadd.f32 %v362, %v538
        %540 = vmatmul.bf16.gmra.mxu0 %v388
        %v541 = vpop.f32.mrf.mxu0
        %v542 = vadd.f32 %v367, %v541
        %v543 = vpop.f32.mrf.mxu0
        %v544 = vadd.f32 %v372, %v543
        %545 = vdwg.mxu0
        %546 = vmatpush.bf16.msra.mxu0 0
        %547 = vmatpush.bf16.msra.mxu0 0
        %548 = vmatpush.bf16.msra.mxu0 0
        %549 = vmatpush.bf16.msra.mxu0 0
        %550 = vmatpush.bf16.msra.mxu0 0
        %551 = vmatpush.bf16.msra.mxu0 0
        %552 = vmatpush.bf16.msra.mxu0 0
        %553 = vmatpush.bf16.msra.mxu0 %v463
        %554 = vmatmul.bf16.gmra.mxu0 %v484
        %v555 = vpop.f32.mrf.mxu0
        %v556 = vadd.f32 %v537, %v555
        %v557 = vpop.f32.mrf.mxu0
        %v558 = vadd.f32 %v539, %v557
        %559 = vmatmul.bf16.gmra.mxu0 %v487
        %v560 = vpop.f32.mrf.mxu0
        %v561 = vadd.f32 %v542, %v560
        %v562 = vpop.f32.mrf.mxu0
        %v563 = vadd.f32 %v544, %v562
        %564 = vdwg.mxu0
        %vm565 = vcmp.gt.f32.partialorder %v518, 0.0
        %vm566 = vcmp.gt.f32.partialorder %v556, 0.0
        %vm567 = vcmp.gt.f32.partialorder %v520, 0.0
        %vm568 = vcmp.gt.f32.partialorder %v558, 0.0
        %vm569 = vcmp.gt.f32.partialorder %v523, 0.0
        %vm570 = vcmp.gt.f32.partialorder %v561, 0.0
        %vm571 = vcmp.gt.f32.partialorder %v525, 0.0
        %vm572 = vcmp.gt.f32.partialorder %v563, 0.0
        %v573 = vmul.f32 %v518, 1.442695
        %v574 = vpow.pop %v573
        %v575 = vmul.f32 %v556, 1.442695
        %v576 = vpow.pop %v575
        %v577 = vmul.f32 %v520, 1.442695
        %v578 = vpow.pop %v577
        %v579 = vmul.f32 %v558, 1.442695
        %v580 = vpow.pop %v579
        %v581 = vmul.f32 %v523, 1.442695
        %v582 = vpow.pop %v581
        %v583 = vmul.f32 %v561, 1.442695
        %v584 = vpow.pop %v583
        %v585 = vmul.f32 %v525, 1.442695
        %v586 = vpow.pop %v585
        %v587 = vmul.f32 %v563, 1.442695
        %v588 = vpow.pop %v587
        %v589 = vsub.f32 %v574, 1.0
        %v590 = vsub.f32 %v576, 1.0
        %v591 = vsub.f32 %v578, 1.0
        %v592 = vsub.f32 %v580, 1.0
        %v593 = vsub.f32 %v582, 1.0
        %v594 = vsub.f32 %v584, 1.0
        %v595 = vsub.f32 %v586, 1.0
        %v596 = vsub.f32 %v588, 1.0
        %v597 = vmul.f32 %v589, 1.6732632
        %v598 = vmul.f32 %v590, 1.6732632
        %v599 = vmul.f32 %v591, 1.6732632
        %v600 = vmul.f32 %v592, 1.6732632
        %v601 = vmul.f32 %v593, 1.6732632
        %v602 = vmul.f32 %v594, 1.6732632
        %v603 = vmul.f32 %v595, 1.6732632
        %v604 = vmul.f32 %v596, 1.6732632
        %v605 = vsel %vm565, %v518, %v597
        %v606 = vsel %vm566, %v556, %v598
        %v607 = vsel %vm567, %v520, %v599
        %v608 = vsel %vm568, %v558, %v600
        %v609 = vsel %vm569, %v523, %v601
        %v610 = vsel %vm570, %v561, %v602
        %v611 = vsel %vm571, %v525, %v603
        %v612 = vsel %vm572, %v563, %v604
        %v613 = vmul.f32 %v605, 1.050701
        %v614 = vmul.f32 %v606, 1.050701
        %v615 = vmul.f32 %v607, 1.050701
        %v616 = vmul.f32 %v608, 1.050701
        %v617 = vmul.f32 %v609, 1.050701
        %v618 = vmul.f32 %v610, 1.050701
        %v619 = vmul.f32 %v611, 1.050701
        %v620 = vmul.f32 %v612, 1.050701
        %v621 = vld [vmem:[%s3] sm:$0xff]
        %v622 = vld [vmem:[%s3 + $0x8] sm:$0xff]
        %v623 = vld [vmem:[%s3 + $0x10] sm:$0xff]
        %v624 = vld [vmem:[%s3 + $0x18] sm:$0xff]
        %v625 = vld [vmem:[%s4] sm:$0xff]
        %v626 = vld [vmem:[%s4 + $0x8] sm:$0xff]
        %v627 = vld [vmem:[%s4 + $0x10] sm:$0xff]
        %v628 = vld [vmem:[%s4 + $0x18] sm:$0xff]
        %630 = vset.pattern.permute.xlu0 0
        %631 = vperm.xlu0 %630, %v625
        %v632 = vpop.permute.xlu0 %631
        %635 = vset.pattern.permute.xlu0 0
        %636 = vperm.xlu0 %635, %v626
        %v637 = vpop.permute.xlu0 %636
        %640 = vset.pattern.permute.xlu0 0
        %641 = vperm.xlu0 %640, %v627
        %v642 = vpop.permute.xlu0 %641
        %645 = vset.pattern.permute.xlu0 0
        %646 = vperm.xlu0 %645, %v628
        %v647 = vpop.permute.xlu0 %646
        %v650 = vsel %vm482, %v621, 0
        %v653 = vsel %vm482, %v622, 0
        %v656 = vsel %vm482, %v623, 0
        %v659 = vsel %vm482, %v624, 0
        %661 = vmatpush.msra.mxu0 0.0
        %662 = vmatpush.msra.mxu0 0.0
        %663 = vmatpush.msra.mxu0 0.0
        %664 = vmatpush.msra.mxu0 0.0
        %665 = vmatpush.msra.mxu0 0.0
        %666 = vmatpush.msra.mxu0 0.0
        %667 = vmatpush.msra.mxu0 0.0
        %668 = vmatpush.msra.mxu0 0.0
        %669 = vmatpush.msra.mxu0 0.0
        %670 = vmatpush.msra.mxu0 0.0
        %671 = vmatpush.msra.mxu0 0.0
        %672 = vmatpush.msra.mxu0 0.0
        %673 = vmatpush.msra.mxu0 0.0
        %674 = vmatpush.msra.mxu0 0.0
        %675 = vmatpush.msra.mxu0 %v615
        %676 = vmatpush.msra.mxu0 %v613
        %677 = vmatmul.f32.gmra.mxu0 %v650
        %v678 = vpop.f32.mrf.mxu0
        %v679 = vadd.f32 %v632, %v678
        %680 = vmatmul.f32.gmra.mxu0 %v653
        %v681 = vpop.f32.mrf.mxu0
        %v682 = vadd.f32 %v637, %v681
        %683 = vmatmul.f32.gmra.mxu0 %v656
        %v684 = vpop.f32.mrf.mxu0
        %v685 = vadd.f32 %v642, %v684
        %686 = vmatmul.f32.gmra.mxu0 %v659
        %v687 = vpop.f32.mrf.mxu0
        %v688 = vadd.f32 %v647, %v687
        %689 = vdwg.mxu0
        %690 = vmatpush.msra.mxu0 0.0
        %691 = vmatpush.msra.mxu0 0.0
        %692 = vmatpush.msra.mxu0 0.0
        %693 = vmatpush.msra.mxu0 0.0
        %694 = vmatpush.msra.mxu0 0.0
        %695 = vmatpush.msra.mxu0 0.0
        %696 = vmatpush.msra.mxu0 0.0
        %697 = vmatpush.msra.mxu0 0.0
        %698 = vmatpush.msra.mxu0 0.0
        %699 = vmatpush.msra.mxu0 0.0
        %700 = vmatpush.msra.mxu0 0.0
        %701 = vmatpush.msra.mxu0 0.0
        %702 = vmatpush.msra.mxu0 0.0
        %703 = vmatpush.msra.mxu0 0.0
        %704 = vmatpush.msra.mxu0 %v616
        %705 = vmatpush.msra.mxu0 %v614
        %706 = vmatmul.f32.gmra.mxu0 %v650
        %v707 = vpop.f32.mrf.mxu0
        %v708 = vadd.f32 %v632, %v707
        %709 = vmatmul.f32.gmra.mxu0 %v653
        %v710 = vpop.f32.mrf.mxu0
        %v711 = vadd.f32 %v637, %v710
        %712 = vmatmul.f32.gmra.mxu0 %v656
        %v713 = vpop.f32.mrf.mxu0
        %v714 = vadd.f32 %v642, %v713
        %715 = vmatmul.f32.gmra.mxu0 %v659
        %v716 = vpop.f32.mrf.mxu0
        %v717 = vadd.f32 %v647, %v716
        %718 = vdwg.mxu0
        %s719 = sld [smem:[#allocation2]]
        %720 = vxpose.xlu0.b32.start [1/16] %v679, 128
        %721 = vxpose.xlu0.b32.cont [2/16] 0.0, 128
        %722 = vxpose.xlu0.b32.cont [3/16] 0.0, 128
        %723 = vxpose.xlu0.b32.cont [4/16] 0.0, 128
        %724 = vxpose.xlu0.b32.cont [5/16] 0.0, 128
        %725 = vxpose.xlu0.b32.cont [6/16] 0.0, 128
        %726 = vxpose.xlu0.b32.cont [7/16] 0.0, 128
        %727 = vxpose.xlu0.b32.cont [8/16] 0.0, 128
        %728 = vxpose.xlu0.b32.cont [9/16] 0.0, 128
        %729 = vxpose.xlu0.b32.cont [10/16] 0.0, 128
        %730 = vxpose.xlu0.b32.cont [11/16] 0.0, 128
        %731 = vxpose.xlu0.b32.cont [12/16] 0.0, 128
        %732 = vxpose.xlu0.b32.cont [13/16] 0.0, 128
        %733 = vxpose.xlu0.b32.cont [14/16] 0.0, 128
        %734 = vxpose.xlu0.b32.cont [15/16] 0.0, 128
        %735 = vxpose.xlu0.b32.end [16/16] 0.0, 128
        %v736 = vpop.trf.xlu0
        %v737 = vpop.trf.xlu0
        %v738 = vpop.trf.xlu0
        %v739 = vpop.trf.xlu0
        %v740 = vpop.trf.xlu0
        %v741 = vpop.trf.xlu0
        %v742 = vpop.trf.xlu0
        %v743 = vpop.trf.xlu0
        %v744 = vpop.trf.xlu0
        %v745 = vpop.trf.xlu0
        %v746 = vpop.trf.xlu0
        %v747 = vpop.trf.xlu0
        %v748 = vpop.trf.xlu0
        %v749 = vpop.trf.xlu0
        %v750 = vpop.trf.xlu0
        %v751 = vpop.trf.xlu0
        %vm752 = vcmask 64512
        %v754 = vsel %vm752, %v736, 0
        %v757 = vsel %vm752, %v737, 0
        %v760 = vsel %vm752, %v738, 0
        %v763 = vsel %vm752, %v739, 0
        %v766 = vsel %vm752, %v740, 0
        %v769 = vsel %vm752, %v741, 0
        %v772 = vsel %vm752, %v742, 0
        %v775 = vsel %vm752, %v743, 0
        %v778 = vsel %vm752, %v744, 0
        %v781 = vsel %vm752, %v745, 0
        %v784 = vsel %vm752, %v746, 0
        %v787 = vsel %vm752, %v747, 0
        %v790 = vsel %vm752, %v748, 0
        %v793 = vsel %vm752, %v749, 0
        %v796 = vsel %vm752, %v750, 0
        %v799 = vsel %vm752, %v751, 0
        %801 = vmatpush.msra.mxu0 0.0
        %802 = vmatpush.msra.mxu0 0.0
        %803 = vmatpush.msra.mxu0 0.0
        %804 = vmatpush.msra.mxu0 0.0
        %805 = vmatpush.msra.mxu0 0.0
        %806 = vmatpush.msra.mxu0 0.0
        %807 = vmatpush.msra.mxu0 0.0
        %808 = vmatpush.msra.mxu0 0.0
        %809 = vmatpush.msra.mxu0 0.0
        %810 = vmatpush.msra.mxu0 0.0
        %811 = vmatpush.msra.mxu0 0.0
        %812 = vmatpush.msra.mxu0 0.0
        %813 = vmatpush.msra.mxu0 0.0
        %814 = vmatpush.msra.mxu0 0.0
        %815 = vmatpush.msra.mxu0 0.0
        %816 = vmatpush.msra.mxu0 %v682
        %817 = vmatmul.f32.gmra.mxu0 %v754
        %v818 = vpop.f32.mrf.mxu0
        %v819 = vadd.f32 0.0, %v818
        %820 = vmatmul.f32.gmra.mxu0 %v757
        %v821 = vpop.f32.mrf.mxu0
        %v822 = vadd.f32 0.0, %v821
        %823 = vmatmul.f32.gmra.mxu0 %v760
        %v824 = vpop.f32.mrf.mxu0
        %v825 = vadd.f32 0.0, %v824
        %826 = vmatmul.f32.gmra.mxu0 %v763
        %v827 = vpop.f32.mrf.mxu0
        %v828 = vadd.f32 0.0, %v827
        %829 = vmatmul.f32.gmra.mxu0 %v766
        %v830 = vpop.f32.mrf.mxu0
        %v831 = vadd.f32 0.0, %v830
        %832 = vmatmul.f32.gmra.mxu0 %v769
        %v833 = vpop.f32.mrf.mxu0
        %v834 = vadd.f32 0.0, %v833
        %835 = vmatmul.f32.gmra.mxu0 %v772
        %v836 = vpop.f32.mrf.mxu0
        %v837 = vadd.f32 0.0, %v836
        %838 = vmatmul.f32.gmra.mxu0 %v775
        %v839 = vpop.f32.mrf.mxu0
        %v840 = vadd.f32 0.0, %v839
        %841 = vmatmul.f32.gmra.mxu0 %v778
        %v842 = vpop.f32.mrf.mxu0
        %v843 = vadd.f32 0.0, %v842
        %844 = vmatmul.f32.gmra.mxu0 %v781
        %v845 = vpop.f32.mrf.mxu0
        %v846 = vadd.f32 0.0, %v845
        %847 = vmatmul.f32.gmra.mxu0 %v784
        %v848 = vpop.f32.mrf.mxu0
        %v849 = vadd.f32 0.0, %v848
        %850 = vmatmul.f32.gmra.mxu0 %v787
        %v851 = vpop.f32.mrf.mxu0
        %v852 = vadd.f32 0.0, %v851
        %853 = vmatmul.f32.gmra.mxu0 %v790
        %v854 = vpop.f32.mrf.mxu0
        %v855 = vadd.f32 0.0, %v854
        %856 = vmatmul.f32.gmra.mxu0 %v793
        %v857 = vpop.f32.mrf.mxu0
        %v858 = vadd.f32 0.0, %v857
        %859 = vmatmul.f32.gmra.mxu0 %v796
        %v860 = vpop.f32.mrf.mxu0
        %v861 = vadd.f32 0.0, %v860
        %862 = vmatmul.f32.gmra.mxu0 %v799
        %v863 = vpop.f32.mrf.mxu0
        %v864 = vadd.f32 0.0, %v863
        %865 = vdwg.mxu0
        %866 = vmax.xlane.f32.xlu0 %v819
        %v867 = vpop.xlane.xlu0 %866
        %868 = vmax.xlane.f32.xlu0 %v822
        %v869 = vpop.xlane.xlu0 %868
        %870 = vmax.xlane.f32.xlu0 %v825
        %v871 = vpop.xlane.xlu0 %870
        %872 = vmax.xlane.f32.xlu0 %v828
        %v873 = vpop.xlane.xlu0 %872
        %874 = vmax.xlane.f32.xlu0 %v831
        %v875 = vpop.xlane.xlu0 %874
        %876 = vmax.xlane.f32.xlu0 %v834
        %v877 = vpop.xlane.xlu0 %876
        %878 = vmax.xlane.f32.xlu0 %v837
        %v879 = vpop.xlane.xlu0 %878
        %880 = vmax.xlane.f32.xlu0 %v840
        %v881 = vpop.xlane.xlu0 %880
        %882 = vmax.xlane.f32.xlu0 %v843
        %v883 = vpop.xlane.xlu0 %882
        %884 = vmax.xlane.f32.xlu0 %v846
        %v885 = vpop.xlane.xlu0 %884
        %886 = vmax.xlane.f32.xlu0 %v849
        %v887 = vpop.xlane.xlu0 %886
        %888 = vmax.xlane.f32.xlu0 %v852
        %v889 = vpop.xlane.xlu0 %888
        %890 = vmax.xlane.f32.xlu0 %v855
        %v891 = vpop.xlane.xlu0 %890
        %892 = vmax.xlane.f32.xlu0 %v858
        %v893 = vpop.xlane.xlu0 %892
        %894 = vmax.xlane.f32.xlu0 %v861
        %v895 = vpop.xlane.xlu0 %894
        %896 = vmax.xlane.f32.xlu0 %v864
        %v897 = vpop.xlane.xlu0 %896
        %v898 = vsub.f32 %v819, %v867
        %v899 = vsub.f32 %v822, %v869
        %v900 = vsub.f32 %v825, %v871
        %v901 = vsub.f32 %v828, %v873
        %v902 = vsub.f32 %v831, %v875
        %v903 = vsub.f32 %v834, %v877
        %v904 = vsub.f32 %v837, %v879
        %v905 = vsub.f32 %v840, %v881
        %v906 = vsub.f32 %v843, %v883
        %v907 = vsub.f32 %v846, %v885
        %v908 = vsub.f32 %v849, %v887
        %v909 = vsub.f32 %v852, %v889
        %v910 = vsub.f32 %v855, %v891
        %v911 = vsub.f32 %v858, %v893
        %v912 = vsub.f32 %v861, %v895
        %v913 = vsub.f32 %v864, %v897
        %v914 = vmul.f32 %v898, 1.442695
        %v915 = vpow.pop %v914
        %v916 = vmul.f32 %v899, 1.442695
        %v917 = vpow.pop %v916
        %v918 = vmul.f32 %v900, 1.442695
        %v919 = vpow.pop %v918
        %v920 = vmul.f32 %v901, 1.442695
        %v921 = vpow.pop %v920
        %v922 = vmul.f32 %v902, 1.442695
        %v923 = vpow.pop %v922
        %v924 = vmul.f32 %v903, 1.442695
        %v925 = vpow.pop %v924
        %v926 = vmul.f32 %v904, 1.442695
        %v927 = vpow.pop %v926
        %v928 = vmul.f32 %v905, 1.442695
        %v929 = vpow.pop %v928
        %v930 = vmul.f32 %v906, 1.442695
        %v931 = vpow.pop %v930
        %v932 = vmul.f32 %v907, 1.442695
        %v933 = vpow.pop %v932
        %v934 = vmul.f32 %v908, 1.442695
        %v935 = vpow.pop %v934
        %v936 = vmul.f32 %v909, 1.442695
        %v937 = vpow.pop %v936
        %v938 = vmul.f32 %v910, 1.442695
        %v939 = vpow.pop %v938
        %v940 = vmul.f32 %v911, 1.442695
        %v941 = vpow.pop %v940
        %v942 = vmul.f32 %v912, 1.442695
        %v943 = vpow.pop %v942
        %v944 = vmul.f32 %v913, 1.442695
        %v945 = vpow.pop %v944
        %946 = vadd.xlane.f32.xlu0 %v915
        %v947 = vpop.xlane.xlu0 %946
        %948 = vadd.xlane.f32.xlu0 %v917
        %v949 = vpop.xlane.xlu0 %948
        %950 = vadd.xlane.f32.xlu0 %v919
        %v951 = vpop.xlane.xlu0 %950
        %952 = vadd.xlane.f32.xlu0 %v921
        %v953 = vpop.xlane.xlu0 %952
        %954 = vadd.xlane.f32.xlu0 %v923
        %v955 = vpop.xlane.xlu0 %954
        %956 = vadd.xlane.f32.xlu0 %v925
        %v957 = vpop.xlane.xlu0 %956
        %958 = vadd.xlane.f32.xlu0 %v927
        %v959 = vpop.xlane.xlu0 %958
        %960 = vadd.xlane.f32.xlu0 %v929
        %v961 = vpop.xlane.xlu0 %960
        %962 = vadd.xlane.f32.xlu0 %v931
        %v963 = vpop.xlane.xlu0 %962
        %964 = vadd.xlane.f32.xlu0 %v933
        %v965 = vpop.xlane.xlu0 %964
        %966 = vadd.xlane.f32.xlu0 %v935
        %v967 = vpop.xlane.xlu0 %966
        %968 = vadd.xlane.f32.xlu0 %v937
        %v969 = vpop.xlane.xlu0 %968
        %970 = vadd.xlane.f32.xlu0 %v939
        %v971 = vpop.xlane.xlu0 %970
        %972 = vadd.xlane.f32.xlu0 %v941
        %v973 = vpop.xlane.xlu0 %972
        %974 = vadd.xlane.f32.xlu0 %v943
        %v975 = vpop.xlane.xlu0 %974
        %976 = vadd.xlane.f32.xlu0 %v945
        %v977 = vpop.xlane.xlu0 %976
        %v978 = vrcp.pop %v947
        %v979 = vrcp.pop %v949
        %v980 = vrcp.pop %v951
        %v981 = vrcp.pop %v953
        %v982 = vrcp.pop %v955
        %v983 = vrcp.pop %v957
        %v984 = vrcp.pop %v959
        %v985 = vrcp.pop %v961
        %v986 = vrcp.pop %v963
        %v987 = vrcp.pop %v965
        %v988 = vrcp.pop %v967
        %v989 = vrcp.pop %v969
        %v990 = vrcp.pop %v971
        %v991 = vrcp.pop %v973
        %v992 = vrcp.pop %v975
        %v993 = vrcp.pop %v977
        %v994 = vmul.f32 %v915, %v978
        %v995 = vmul.f32 %v917, %v979
        %v996 = vmul.f32 %v919, %v980
        %v997 = vmul.f32 %v921, %v981
        %v998 = vmul.f32 %v923, %v982
        %v999 = vmul.f32 %v925, %v983
        %v1000 = vmul.f32 %v927, %v984
        %v1001 = vmul.f32 %v929, %v985
        %v1002 = vmul.f32 %v931, %v986
        %v1003 = vmul.f32 %v933, %v987
        %v1004 = vmul.f32 %v935, %v988
        %v1005 = vmul.f32 %v937, %v989
        %v1006 = vmul.f32 %v939, %v990
        %v1007 = vmul.f32 %v941, %v991
        %v1008 = vmul.f32 %v943, %v992
        %v1009 = vmul.f32 %v945, %v993
        %1010 = vmatpush.xpose.msra.mxu0 %v1009
        %1011 = vmatpush.xpose.msra.mxu0 %v1008
        %1012 = vmatpush.xpose.msra.mxu0 %v1007
        %1013 = vmatpush.xpose.msra.mxu0 %v1006
        %1014 = vmatpush.xpose.msra.mxu0 %v1005
        %1015 = vmatpush.xpose.msra.mxu0 %v1004
        %1016 = vmatpush.xpose.msra.mxu0 %v1003
        %1017 = vmatpush.xpose.msra.mxu0 %v1002
        %1018 = vmatpush.xpose.msra.mxu0 %v1001
        %1019 = vmatpush.xpose.msra.mxu0 %v1000
        %1020 = vmatpush.xpose.msra.mxu0 %v999
        %1021 = vmatpush.xpose.msra.mxu0 %v998
        %1022 = vmatpush.xpose.msra.mxu0 %v997
        %1023 = vmatpush.xpose.msra.mxu0 %v996
        %1024 = vmatpush.xpose.msra.mxu0 %v995
        %1025 = vmatpush.xpose.msra.mxu0 %v994
        %1026 = vmatmul.f32.gmra.mxu0 %v685
        %v1027 = vpop.f32.mrf.mxu0
        %v1028 = vadd.f32 %v613, %v1027
        %1029 = vmatmul.f32.gmra.mxu0 %v688
        %v1030 = vpop.f32.mrf.mxu0
        %v1031 = vadd.f32 %v615, %v1030
        %1032 = vdwg.mxu0
        %1033 = vmatpush.xpose.msra.mxu0 0.0
        %1034 = vmatpush.xpose.msra.mxu0 0.0
        %1035 = vmatpush.xpose.msra.mxu0 0.0
        %1036 = vmatpush.xpose.msra.mxu0 0.0
        %1037 = vmatpush.xpose.msra.mxu0 0.0
        %1038 = vmatpush.xpose.msra.mxu0 0.0
        %1039 = vmatpush.xpose.msra.mxu0 0.0
        %1040 = vmatpush.xpose.msra.mxu0 0.0
        %1041 = vmatpush.xpose.msra.mxu0 0.0
        %1042 = vmatpush.xpose.msra.mxu0 0.0
        %1043 = vmatpush.xpose.msra.mxu0 0.0
        %1044 = vmatpush.xpose.msra.mxu0 0.0
        %1045 = vmatpush.xpose.msra.mxu0 0.0
        %1046 = vmatpush.xpose.msra.mxu0 0.0
        %1047 = vmatpush.xpose.msra.mxu0 %v619
        %1048 = vmatpush.xpose.msra.mxu0 %v617
        %1049 = vmatmul.f32.gmra.mxu0 %v617
        %v1050 = vpop.f32.mrf.mxu0
        %v1051 = vadd.f32 0.0, %v1050
        %1052 = vmatmul.f32.gmra.mxu0 %v619
        %v1053 = vpop.f32.mrf.mxu0
        %v1054 = vadd.f32 0.0, %v1053
        %1055 = vdwg.mxu0
        %v1056 = vsel %vm482, %v1051, inf
        %1057 = vmin.xlane.f32.xlu0 %v1056
        %v1058 = vpop.xlane.xlu0 %1057
        %v1059 = vsel %vm482, %v1054, inf
        %1060 = vmin.xlane.f32.xlu0 %v1059
        %v1061 = vpop.xlane.xlu0 %1060
        %v1062 = vsub.f32 %v1058, %v1051
        %v1063 = vsub.f32 %v1061, %v1054
        %v1064 = vmul.f32 %v1062, 1.442695
        %v1065 = vpow.pop %v1064
        %v1066 = vmul.f32 %v1063, 1.442695
        %v1067 = vpow.pop %v1066
        %v1068 = vsel %vm482, %v1065, 0.0
        %1069 = vadd.xlane.f32.xlu0 %v1068
        %v1070 = vpop.xlane.xlu0 %1069
        %v1071 = vsel %vm482, %v1067, 0.0
        %1072 = vadd.xlane.f32.xlu0 %v1071
        %v1073 = vpop.xlane.xlu0 %1072
        %v1074 = vrcp.pop %v1070
        %v1075 = vrcp.pop %v1073
        %v1076 = vstv %s719
        %v1077 = vmul.f32 %v1076, %v1074
        %v1078 = vmul.f32 %v1076, %v1075
        %v1079 = vmul.f32 %v1065, %v1077
        %v1080 = vmul.f32 %v1067, %v1078
        %v1082 = vsel %vm482, %v1079, 0
        %v1085 = vsel %vm482, %v1080, 0
        %1087 = vmatpush.msra.mxu0 0.0
        %1088 = vmatpush.msra.mxu0 0.0
        %1089 = vmatpush.msra.mxu0 0.0
        %1090 = vmatpush.msra.mxu0 0.0
        %1091 = vmatpush.msra.mxu0 0.0
        %1092 = vmatpush.msra.mxu0 0.0
        %1093 = vmatpush.msra.mxu0 0.0
        %1094 = vmatpush.msra.mxu0 0.0
        %1095 = vmatpush.msra.mxu0 0.0
        %1096 = vmatpush.msra.mxu0 0.0
        %1097 = vmatpush.msra.mxu0 0.0
        %1098 = vmatpush.msra.mxu0 0.0
        %1099 = vmatpush.msra.mxu0 0.0
        %1100 = vmatpush.msra.mxu0 0.0
        %1101 = vmatpush.msra.mxu0 %v619
        %1102 = vmatpush.msra.mxu0 %v617
        %1103 = vmatmul.f32.gmra.mxu0 %v1082
        %v1104 = vpop.f32.mrf.mxu0
        %v1105 = vadd.f32 %v617, %v1104
        %1106 = vmatmul.f32.gmra.mxu0 %v1085
        %v1107 = vpop.f32.mrf.mxu0
        %v1108 = vadd.f32 %v619, %v1107
        %1109 = vdwg.mxu0
        %v1110 = vadd.f32 %v1028, %v1105
        %v1111 = vadd.f32 %v1031, %v1108
        %1112 = vxpose.xlu0.b32.start [1/16] %v708, 128
        %1113 = vxpose.xlu0.b32.cont [2/16] 0.0, 128
        %1114 = vxpose.xlu0.b32.cont [3/16] 0.0, 128
        %1115 = vxpose.xlu0.b32.cont [4/16] 0.0, 128
        %1116 = vxpose.xlu0.b32.cont [5/16] 0.0, 128
        %1117 = vxpose.xlu0.b32.cont [6/16] 0.0, 128
        %1118 = vxpose.xlu0.b32.cont [7/16] 0.0, 128
        %1119 = vxpose.xlu0.b32.cont [8/16] 0.0, 128
        %1120 = vxpose.xlu0.b32.cont [9/16] 0.0, 128
        %1121 = vxpose.xlu0.b32.cont [10/16] 0.0, 128
        %1122 = vxpose.xlu0.b32.cont [11/16] 0.0, 128
        %1123 = vxpose.xlu0.b32.cont [12/16] 0.0, 128
        %1124 = vxpose.xlu0.b32.cont [13/16] 0.0, 128
        %1125 = vxpose.xlu0.b32.cont [14/16] 0.0, 128
        %1126 = vxpose.xlu0.b32.cont [15/16] 0.0, 128
        %1127 = vxpose.xlu0.b32.end [16/16] 0.0, 128
        %v1128 = vpop.trf.xlu0
        %v1129 = vpop.trf.xlu0
        %v1130 = vpop.trf.xlu0
        %v1131 = vpop.trf.xlu0
        %v1132 = vpop.trf.xlu0
        %v1133 = vpop.trf.xlu0
        %v1134 = vpop.trf.xlu0
        %v1135 = vpop.trf.xlu0
        %v1136 = vpop.trf.xlu0
        %v1137 = vpop.trf.xlu0
        %v1138 = vpop.trf.xlu0
        %v1139 = vpop.trf.xlu0
        %v1140 = vpop.trf.xlu0
        %v1141 = vpop.trf.xlu0
        %v1142 = vpop.trf.xlu0
        %v1143 = vpop.trf.xlu0
        %v1145 = vsel %vm752, %v1128, 0
        %v1148 = vsel %vm752, %v1129, 0
        %v1151 = vsel %vm752, %v1130, 0
        %v1154 = vsel %vm752, %v1131, 0
        %v1157 = vsel %vm752, %v1132, 0
        %v1160 = vsel %vm752, %v1133, 0
        %v1163 = vsel %vm752, %v1134, 0
        %v1166 = vsel %vm752, %v1135, 0
        %v1169 = vsel %vm752, %v1136, 0
        %v1172 = vsel %vm752, %v1137, 0
        %v1175 = vsel %vm752, %v1138, 0
        %v1178 = vsel %vm752, %v1139, 0
        %v1181 = vsel %vm752, %v1140, 0
        %v1184 = vsel %vm752, %v1141, 0
        %v1187 = vsel %vm752, %v1142, 0
        %v1190 = vsel %vm752, %v1143, 0
        %1192 = vmatpush.msra.mxu0 0.0
        %1193 = vmatpush.msra.mxu0 0.0
        %1194 = vmatpush.msra.mxu0 0.0
        %1195 = vmatpush.msra.mxu0 0.0
        %1196 = vmatpush.msra.mxu0 0.0
        %1197 = vmatpush.msra.mxu0 0.0
        %1198 = vmatpush.msra.mxu0 0.0
        %1199 = vmatpush.msra.mxu0 0.0
        %1200 = vmatpush.msra.mxu0 0.0
        %1201 = vmatpush.msra.mxu0 0.0
        %1202 = vmatpush.msra.mxu0 0.0
        %1203 = vmatpush.msra.mxu0 0.0
        %1204 = vmatpush.msra.mxu0 0.0
        %1205 = vmatpush.msra.mxu0 0.0
        %1206 = vmatpush.msra.mxu0 0.0
        %1207 = vmatpush.msra.mxu0 %v711
        %1208 = vmatmul.f32.gmra.mxu0 %v1145
        %v1209 = vpop.f32.mrf.mxu0
        %v1210 = vadd.f32 0.0, %v1209
        %1211 = vmatmul.f32.gmra.mxu0 %v1148
        %v1212 = vpop.f32.mrf.mxu0
        %v1213 = vadd.f32 0.0, %v1212
        %1214 = vmatmul.f32.gmra.mxu0 %v1151
        %v1215 = vpop.f32.mrf.mxu0
        %v1216 = vadd.f32 0.0, %v1215
        %1217 = vmatmul.f32.gmra.mxu0 %v1154
        %v1218 = vpop.f32.mrf.mxu0
        %v1219 = vadd.f32 0.0, %v1218
        %1220 = vmatmul.f32.gmra.mxu0 %v1157
        %v1221 = vpop.f32.mrf.mxu0
        %v1222 = vadd.f32 0.0, %v1221
        %1223 = vmatmul.f32.gmra.mxu0 %v1160
        %v1224 = vpop.f32.mrf.mxu0
        %v1225 = vadd.f32 0.0, %v1224
        %1226 = vmatmul.f32.gmra.mxu0 %v1163
        %v1227 = vpop.f32.mrf.mxu0
        %v1228 = vadd.f32 0.0, %v1227
        %1229 = vmatmul.f32.gmra.mxu0 %v1166
        %v1230 = vpop.f32.mrf.mxu0
        %v1231 = vadd.f32 0.0, %v1230
        %1232 = vmatmul.f32.gmra.mxu0 %v1169
        %v1233 = vpop.f32.mrf.mxu0
        %v1234 = vadd.f32 0.0, %v1233
        %1235 = vmatmul.f32.gmra.mxu0 %v1172
        %v1236 = vpop.f32.mrf.mxu0
        %v1237 = vadd.f32 0.0, %v1236
        %1238 = vmatmul.f32.gmra.mxu0 %v1175
        %v1239 = vpop.f32.mrf.mxu0
        %v1240 = vadd.f32 0.0, %v1239
        %1241 = vmatmul.f32.gmra.mxu0 %v1178
        %v1242 = vpop.f32.mrf.mxu0
        %v1243 = vadd.f32 0.0, %v1242
        %1244 = vmatmul.f32.gmra.mxu0 %v1181
        %v1245 = vpop.f32.mrf.mxu0
        %v1246 = vadd.f32 0.0, %v1245
        %1247 = vmatmul.f32.gmra.mxu0 %v1184
        %v1248 = vpop.f32.mrf.mxu0
        %v1249 = vadd.f32 0.0, %v1248
        %1250 = vmatmul.f32.gmra.mxu0 %v1187
        %v1251 = vpop.f32.mrf.mxu0
        %v1252 = vadd.f32 0.0, %v1251
        %1253 = vmatmul.f32.gmra.mxu0 %v1190
        %v1254 = vpop.f32.mrf.mxu0
        %v1255 = vadd.f32 0.0, %v1254
        %1256 = vdwg.mxu0
        %1257 = vmax.xlane.f32.xlu0 %v1210
        %v1258 = vpop.xlane.xlu0 %1257
        %1259 = vmax.xlane.f32.xlu0 %v1213
        %v1260 = vpop.xlane.xlu0 %1259
        %1261 = vmax.xlane.f32.xlu0 %v1216
        %v1262 = vpop.xlane.xlu0 %1261
        %1263 = vmax.xlane.f32.xlu0 %v1219
        %v1264 = vpop.xlane.xlu0 %1263
        %1265 = vmax.xlane.f32.xlu0 %v1222
        %v1266 = vpop.xlane.xlu0 %1265
        %1267 = vmax.xlane.f32.xlu0 %v1225
        %v1268 = vpop.xlane.xlu0 %1267
        %1269 = vmax.xlane.f32.xlu0 %v1228
        %v1270 = vpop.xlane.xlu0 %1269
        %1271 = vmax.xlane.f32.xlu0 %v1231
        %v1272 = vpop.xlane.xlu0 %1271
        %1273 = vmax.xlane.f32.xlu0 %v1234
        %v1274 = vpop.xlane.xlu0 %1273
        %1275 = vmax.xlane.f32.xlu0 %v1237
        %v1276 = vpop.xlane.xlu0 %1275
        %1277 = vmax.xlane.f32.xlu0 %v1240
        %v1278 = vpop.xlane.xlu0 %1277
        %1279 = vmax.xlane.f32.xlu0 %v1243
        %v1280 = vpop.xlane.xlu0 %1279
        %1281 = vmax.xlane.f32.xlu0 %v1246
        %v1282 = vpop.xlane.xlu0 %1281
        %1283 = vmax.xlane.f32.xlu0 %v1249
        %v1284 = vpop.xlane.xlu0 %1283
        %1285 = vmax.xlane.f32.xlu0 %v1252
        %v1286 = vpop.xlane.xlu0 %1285
        %1287 = vmax.xlane.f32.xlu0 %v1255
        %v1288 = vpop.xlane.xlu0 %1287
        %v1289 = vsub.f32 %v1210, %v1258
        %v1290 = vsub.f32 %v1213, %v1260
        %v1291 = vsub.f32 %v1216, %v1262
        %v1292 = vsub.f32 %v1219, %v1264
        %v1293 = vsub.f32 %v1222, %v1266
        %v1294 = vsub.f32 %v1225, %v1268
        %v1295 = vsub.f32 %v1228, %v1270
        %v1296 = vsub.f32 %v1231, %v1272
        %v1297 = vsub.f32 %v1234, %v1274
        %v1298 = vsub.f32 %v1237, %v1276
        %v1299 = vsub.f32 %v1240, %v1278
        %v1300 = vsub.f32 %v1243, %v1280
        %v1301 = vsub.f32 %v1246, %v1282
        %v1302 = vsub.f32 %v1249, %v1284
        %v1303 = vsub.f32 %v1252, %v1286
        %v1304 = vsub.f32 %v1255, %v1288
        %v1305 = vmul.f32 %v1289, 1.442695
        %v1306 = vpow.pop %v1305
        %v1307 = vmul.f32 %v1290, 1.442695
        %v1308 = vpow.pop %v1307
        %v1309 = vmul.f32 %v1291, 1.442695
        %v1310 = vpow.pop %v1309
        %v1311 = vmul.f32 %v1292, 1.442695
        %v1312 = vpow.pop %v1311
        %v1313 = vmul.f32 %v1293, 1.442695
        %v1314 = vpow.pop %v1313
        %v1315 = vmul.f32 %v1294, 1.442695
        %v1316 = vpow.pop %v1315
        %v1317 = vmul.f32 %v1295, 1.442695
        %v1318 = vpow.pop %v1317
        %v1319 = vmul.f32 %v1296, 1.442695
        %v1320 = vpow.pop %v1319
        %v1321 = vmul.f32 %v1297, 1.442695
        %v1322 = vpow.pop %v1321
        %v1323 = vmul.f32 %v1298, 1.442695
        %v1324 = vpow.pop %v1323
        %v1325 = vmul.f32 %v1299, 1.442695
        %v1326 = vpow.pop %v1325
        %v1327 = vmul.f32 %v1300, 1.442695
        %v1328 = vpow.pop %v1327
        %v1329 = vmul.f32 %v1301, 1.442695
        %v1330 = vpow.pop %v1329
        %v1331 = vmul.f32 %v1302, 1.442695
        %v1332 = vpow.pop %v1331
        %v1333 = vmul.f32 %v1303, 1.442695
        %v1334 = vpow.pop %v1333
        %v1335 = vmul.f32 %v1304, 1.442695
        %v1336 = vpow.pop %v1335
        %1337 = vadd.xlane.f32.xlu0 %v1306
        %v1338 = vpop.xlane.xlu0 %1337
        %1339 = vadd.xlane.f32.xlu0 %v1308
        %v1340 = vpop.xlane.xlu0 %1339
        %1341 = vadd.xlane.f32.xlu0 %v1310
        %v1342 = vpop.xlane.xlu0 %1341
        %1343 = vadd.xlane.f32.xlu0 %v1312
        %v1344 = vpop.xlane.xlu0 %1343
        %1345 = vadd.xlane.f32.xlu0 %v1314
        %v1346 = vpop.xlane.xlu0 %1345
        %1347 = vadd.xlane.f32.xlu0 %v1316
        %v1348 = vpop.xlane.xlu0 %1347
        %1349 = vadd.xlane.f32.xlu0 %v1318
        %v1350 = vpop.xlane.xlu0 %1349
        %1351 = vadd.xlane.f32.xlu0 %v1320
        %v1352 = vpop.xlane.xlu0 %1351
        %1353 = vadd.xlane.f32.xlu0 %v1322
        %v1354 = vpop.xlane.xlu0 %1353
        %1355 = vadd.xlane.f32.xlu0 %v1324
        %v1356 = vpop.xlane.xlu0 %1355
        %1357 = vadd.xlane.f32.xlu0 %v1326
        %v1358 = vpop.xlane.xlu0 %1357
        %1359 = vadd.xlane.f32.xlu0 %v1328
        %v1360 = vpop.xlane.xlu0 %1359
        %1361 = vadd.xlane.f32.xlu0 %v1330
        %v1362 = vpop.xlane.xlu0 %1361
        %1363 = vadd.xlane.f32.xlu0 %v1332
        %v1364 = vpop.xlane.xlu0 %1363
        %1365 = vadd.xlane.f32.xlu0 %v1334
        %v1366 = vpop.xlane.xlu0 %1365
        %1367 = vadd.xlane.f32.xlu0 %v1336
        %v1368 = vpop.xlane.xlu0 %1367
        %v1369 = vrcp.pop %v1338
        %v1370 = vrcp.pop %v1340
        %v1371 = vrcp.pop %v1342
        %v1372 = vrcp.pop %v1344
        %v1373 = vrcp.pop %v1346
        %v1374 = vrcp.pop %v1348
        %v1375 = vrcp.pop %v1350
        %v1376 = vrcp.pop %v1352
        %v1377 = vrcp.pop %v1354
        %v1378 = vrcp.pop %v1356
        %v1379 = vrcp.pop %v1358
        %v1380 = vrcp.pop %v1360
        %v1381 = vrcp.pop %v1362
        %v1382 = vrcp.pop %v1364
        %v1383 = vrcp.pop %v1366
        %v1384 = vrcp.pop %v1368
        %v1385 = vmul.f32 %v1306, %v1369
        %v1386 = vmul.f32 %v1308, %v1370
        %v1387 = vmul.f32 %v1310, %v1371
        %v1388 = vmul.f32 %v1312, %v1372
        %v1389 = vmul.f32 %v1314, %v1373
        %v1390 = vmul.f32 %v1316, %v1374
        %v1391 = vmul.f32 %v1318, %v1375
        %v1392 = vmul.f32 %v1320, %v1376
        %v1393 = vmul.f32 %v1322, %v1377
        %v1394 = vmul.f32 %v1324, %v1378
        %v1395 = vmul.f32 %v1326, %v1379
        %v1396 = vmul.f32 %v1328, %v1380
        %v1397 = vmul.f32 %v1330, %v1381
        %v1398 = vmul.f32 %v1332, %v1382
        %v1399 = vmul.f32 %v1334, %v1383
        %v1400 = vmul.f32 %v1336, %v1384
        %1401 = vmatpush.xpose.msra.mxu0 %v1400
        %1402 = vmatpush.xpose.msra.mxu0 %v1399
        %1403 = vmatpush.xpose.msra.mxu0 %v1398
        %1404 = vmatpush.xpose.msra.mxu0 %v1397
        %1405 = vmatpush.xpose.msra.mxu0 %v1396
        %1406 = vmatpush.xpose.msra.mxu0 %v1395
        %1407 = vmatpush.xpose.msra.mxu0 %v1394
        %1408 = vmatpush.xpose.msra.mxu0 %v1393
        %1409 = vmatpush.xpose.msra.mxu0 %v1392
        %1410 = vmatpush.xpose.msra.mxu0 %v1391
        %1411 = vmatpush.xpose.msra.mxu0 %v1390
        %1412 = vmatpush.xpose.msra.mxu0 %v1389
        %1413 = vmatpush.xpose.msra.mxu0 %v1388
        %1414 = vmatpush.xpose.msra.mxu0 %v1387
        %1415 = vmatpush.xpose.msra.mxu0 %v1386
        %1416 = vmatpush.xpose.msra.mxu0 %v1385
        %1417 = vmatmul.f32.gmra.mxu0 %v714
        %v1418 = vpop.f32.mrf.mxu0
        %v1419 = vadd.f32 %v614, %v1418
        %1420 = vmatmul.f32.gmra.mxu0 %v717
        %v1421 = vpop.f32.mrf.mxu0
        %v1422 = vadd.f32 %v616, %v1421
        %1423 = vdwg.mxu0
        %1424 = vmatpush.xpose.msra.mxu0 0.0
        %1425 = vmatpush.xpose.msra.mxu0 0.0
        %1426 = vmatpush.xpose.msra.mxu0 0.0
        %1427 = vmatpush.xpose.msra.mxu0 0.0
        %1428 = vmatpush.xpose.msra.mxu0 0.0
        %1429 = vmatpush.xpose.msra.mxu0 0.0
        %1430 = vmatpush.xpose.msra.mxu0 0.0
        %1431 = vmatpush.xpose.msra.mxu0 0.0
        %1432 = vmatpush.xpose.msra.mxu0 0.0
        %1433 = vmatpush.xpose.msra.mxu0 0.0
        %1434 = vmatpush.xpose.msra.mxu0 0.0
        %1435 = vmatpush.xpose.msra.mxu0 0.0
        %1436 = vmatpush.xpose.msra.mxu0 0.0
        %1437 = vmatpush.xpose.msra.mxu0 0.0
        %1438 = vmatpush.xpose.msra.mxu0 %v620
        %1439 = vmatpush.xpose.msra.mxu0 %v618
        %1440 = vmatmul.f32.gmra.mxu0 %v618
        %v1441 = vpop.f32.mrf.mxu0
        %v1442 = vadd.f32 0.0, %v1441
        %1443 = vmatmul.f32.gmra.mxu0 %v620
        %v1444 = vpop.f32.mrf.mxu0
        %v1445 = vadd.f32 0.0, %v1444
        %1446 = vdwg.mxu0
        %v1447 = vsel %vm482, %v1442, inf
        %1448 = vmin.xlane.f32.xlu0 %v1447
        %v1449 = vpop.xlane.xlu0 %1448
        %v1450 = vsel %vm482, %v1445, inf
        %1451 = vmin.xlane.f32.xlu0 %v1450
        %v1452 = vpop.xlane.xlu0 %1451
        %v1453 = vsub.f32 %v1449, %v1442
        %v1454 = vsub.f32 %v1452, %v1445
        %v1455 = vmul.f32 %v1453, 1.442695
        %v1456 = vpow.pop %v1455
        %v1457 = vmul.f32 %v1454, 1.442695
        %v1458 = vpow.pop %v1457
        %v1459 = vsel %vm482, %v1456, 0.0
        %1460 = vadd.xlane.f32.xlu0 %v1459
        %v1461 = vpop.xlane.xlu0 %1460
        %v1462 = vsel %vm482, %v1458, 0.0
        %1463 = vadd.xlane.f32.xlu0 %v1462
        %v1464 = vpop.xlane.xlu0 %1463
        %v1465 = vrcp.pop %v1461
        %v1466 = vrcp.pop %v1464
        %v1467 = vmul.f32 %v1076, %v1465
        %v1468 = vmul.f32 %v1076, %v1466
        %v1469 = vmul.f32 %v1456, %v1467
        %v1470 = vmul.f32 %v1458, %v1468
        %v1472 = vsel %vm482, %v1469, 0
        %v1475 = vsel %vm482, %v1470, 0
        %1477 = vmatpush.msra.mxu0 0.0
        %1478 = vmatpush.msra.mxu0 0.0
        %1479 = vmatpush.msra.mxu0 0.0
        %1480 = vmatpush.msra.mxu0 0.0
        %1481 = vmatpush.msra.mxu0 0.0
        %1482 = vmatpush.msra.mxu0 0.0
        %1483 = vmatpush.msra.mxu0 0.0
        %1484 = vmatpush.msra.mxu0 0.0
        %1485 = vmatpush.msra.mxu0 0.0
        %1486 = vmatpush.msra.mxu0 0.0
        %1487 = vmatpush.msra.mxu0 0.0
        %1488 = vmatpush.msra.mxu0 0.0
        %1489 = vmatpush.msra.mxu0 0.0
        %1490 = vmatpush.msra.mxu0 0.0
        %1491 = vmatpush.msra.mxu0 %v620
        %1492 = vmatpush.msra.mxu0 %v618
        %1493 = vmatmul.f32.gmra.mxu0 %v1472
        %v1494 = vpop.f32.mrf.mxu0
        %v1495 = vadd.f32 %v618, %v1494
        %1496 = vmatmul.f32.gmra.mxu0 %v1475
        %v1497 = vpop.f32.mrf.mxu0
        %v1498 = vadd.f32 %v620, %v1497
        %1499 = vdwg.mxu0
        %v1500 = vadd.f32 %v1419, %v1495
        %v1501 = vadd.f32 %v1422, %v1498
        %v1502 = vld [vmem:[%s5] sm:$0xff]
        %v1503 = vld [vmem:[%s6] sm:$0xff]
        %1505 = vset.pattern.permute.xlu0 0
        %1506 = vperm.xlu0 %1505, %v1503
        %v1507 = vpop.permute.xlu0 %1506
        %v1510 = vsel %vm482, %v1502, 0
        %1512 = vmatpush.msra.mxu0 0.0
        %1513 = vmatpush.msra.mxu0 0.0
        %1514 = vmatpush.msra.mxu0 0.0
        %1515 = vmatpush.msra.mxu0 0.0
        %1516 = vmatpush.msra.mxu0 0.0
        %1517 = vmatpush.msra.mxu0 0.0
        %1518 = vmatpush.msra.mxu0 0.0
        %1519 = vmatpush.msra.mxu0 0.0
        %1520 = vmatpush.msra.mxu0 0.0
        %1521 = vmatpush.msra.mxu0 0.0
        %1522 = vmatpush.msra.mxu0 0.0
        %1523 = vmatpush.msra.mxu0 0.0
        %1524 = vmatpush.msra.mxu0 0.0
        %1525 = vmatpush.msra.mxu0 0.0
        %1526 = vmatpush.msra.mxu0 %v1111
        %1527 = vmatpush.msra.mxu0 %v1110
        %1528 = vmatmul.f32.gmra.mxu0 %v1510
        %v1529 = vpop.f32.mrf.mxu0
        %v1530 = vadd.f32 %v1507, %v1529
        %1531 = vdwg.mxu0
        %1532 = vmatpush.msra.mxu0 0.0
        %1533 = vmatpush.msra.mxu0 0.0
        %1534 = vmatpush.msra.mxu0 0.0
        %1535 = vmatpush.msra.mxu0 0.0
        %1536 = vmatpush.msra.mxu0 0.0
        %1537 = vmatpush.msra.mxu0 0.0
        %1538 = vmatpush.msra.mxu0 0.0
        %1539 = vmatpush.msra.mxu0 0.0
        %1540 = vmatpush.msra.mxu0 0.0
        %1541 = vmatpush.msra.mxu0 0.0
        %1542 = vmatpush.msra.mxu0 0.0
        %1543 = vmatpush.msra.mxu0 0.0
        %1544 = vmatpush.msra.mxu0 0.0
        %1545 = vmatpush.msra.mxu0 0.0
        %1546 = vmatpush.msra.mxu0 %v1501
        %1547 = vmatpush.msra.mxu0 %v1500
        %1548 = vmatmul.f32.gmra.mxu0 %v1510
        %v1549 = vpop.f32.mrf.mxu0
        %v1550 = vadd.f32 %v1507, %v1549
        %1551 = vdwg.mxu0
        %1552 = vst [vmem:[%s326] sm:$0xff] %v1530
        %1553 = vst [vmem:[%s326 + $0x8] sm:$0xff] %v1550
        %s1554 = sand.u32 %s207, 1
        %s1555 = scalar_lea.sflag [#allocation5], %s1554
        %s1556 = sand.u32 %s207, 1
        %s1557 = smul.addr %s1556, 16
        %s1558 = scalar_lea.vmem [#allocation6], %s1557
        // Predicated region
        $region57: #{tpu_custom_call.1} parent=51 // pred_check
          %p1559 = pneg %p217
        $region58: #{tpu_custom_call.1} parent=51 // pred_check_branch
          %1561 = sbr.rel (%p1559) target = $region60
        $region59: #{tpu_custom_call.1} parent=51 // pred_region
          %1563 = vsyncadd %s1555, 0
          %s1564 = smul.addr %s26, 2
          %s1565 = smul.addr %s1564, 8
          %s1566 = scalar_lea.hbm %s8, %s1565
          %s1568 = sshll.u32 %s1558, 4
          %s1569 = int_to_ptr.vmem [resolvable:$true] %s1568
          %s1570 = sshll.u32 %s1566, 4
          %s1571 = int_to_ptr.hbm [resolvable:$true] %s1570
          %1573 = dma.vmem_to_hbm [thread:$0]  %s1569, 256, %s1571, %s1555
        $region60: #{tpu_custom_call.1} parent=51 // pred_fallthru
          _
      $region52: #{tpu_custom_call.1} parent=5 // pred_fallthru
        _
      %p1574 = scmp.le.s32.totalorder 2, %s21
      // Predicated region
      $region61: #{tpu_custom_call.1} parent=5 // pred_check
        %p1575 = pneg %p1574
      $region62: #{tpu_custom_call.1} parent=5 // pred_check_branch
        %1577 = sbr.rel (%p1575) target = $region64
      $region63: #{tpu_custom_call.1} parent=5 // pred_region
        %s1578 = ssub.s32 %s21, 2
        // Predicated region
        $region65: #{tpu_custom_call.1} parent=63 // pred_check
          %p1579 = pneg %p223
        $region66: #{tpu_custom_call.1} parent=63 // pred_check_branch
          %1581 = sbr.rel (%p1579) target = $region68
        $region67: #{tpu_custom_call.1} parent=63 // pred_region
          %s1582 = sand.u32 %s208, 1
          %s1583 = scalar_lea.sflag [#allocation5], %s1582
          %s1584 = sand.u32 %s208, 1
          %s1585 = smul.addr %s1584, 16
          %s1586 = scalar_lea.vmem [#allocation6], %s1585
          %1588 = dma.done %s1583, 256
        $region68: #{tpu_custom_call.1} parent=63 // pred_fallthru
          _
      $region64: #{tpu_custom_call.1} parent=5 // pred_fallthru
        _
    $region6: #{tpu_custom_call.1} parent=1 // loop_footer
      %s25 = sadd.s32 1, %s21
    $region7: #{tpu_custom_call.1} parent=1 // loop_footer_branch
      %20 = sbr.rel target = $region3
    $region8: #{tpu_custom_call.1} parent=1 // loop_exit
      _
    %1589 = vsyncpa [#allocation4], 1
    %s1590 = scalar_lea.sflag [#allocation4], 1
    %1591 = vsyncpa %s1590, 1
    %1592 = vsyncpa [#allocation5], 1
    %s1593 = scalar_lea.sflag [#allocation5], 1
    %1594 = vsyncpa %s1593, 1

</llo_original>
